<compile_context>
chip_gen: v7x
topology: tpu7x:2x2x1
jax: 0.10.0
libtpu: 0.0.40
codegen_flags: <defaults>
</compile_context>

<pallas_src>
import math

import jax
import jax.numpy as jnp
from jax import lax
from jax.experimental import pallas as pl
from jax.experimental.pallas import tpu as pltpu

_EPS = 1e-8
_LOG_EPS = math.log(_EPS)

# ----------------------------------------------------------------------------
# In-kernel log-gamma: Lanczos (g=7) with the partial-fraction sum rewritten as
# a single rational polynomial P(z)/Q(z).  Coefficients are expanded once at
# import time in float64 (Python floats) and baked in as constants.
# ----------------------------------------------------------------------------
_LANCZOS_G = 7.0
_HALF_LOG_2PI = 0.9189385332046727
_LANCZOS_COEFS = (
    0.99999999999980993,
    676.5203681218851,
    -1259.1392167224028,
    771.32342877765313,
    -176.61502916214059,
    12.507343278686905,
    -0.13857109526572012,
    9.9843695780195716e-6,
    1.5056327351493116e-7,
)


def _poly_mul(a, b):          # lowest-degree-first coefficient lists
    out = [0.0] * (len(a) + len(b) - 1)
    for i, ai in enumerate(a):
        for j, bj in enumerate(b):
            out[i + j] += ai * bj
    return out


def _poly_add(a, b):
    n = max(len(a), len(b))
    return [(a[i] if i < len(a) else 0.0) + (b[i] if i < len(b) else 0.0)
            for i in range(n)]


def _poly_scale(a, s):
    return [s * v for v in a]


def _lanczos_rational():
    """A(z) = c0 + sum_i c_i/(z+i)  ==  P(z) / Q(z), Q(z) = prod_i (z+i)."""
    n = len(_LANCZOS_COEFS) - 1                     # 8
    q = [1.0]
    for i in range(1, n + 1):
        q = _poly_mul(q, [float(i), 1.0])
    p = _poly_scale(q, _LANCZOS_COEFS[0])
    for i in range(1, n + 1):
        pi = [1.0]
        for j in range(1, n + 1):
            if j != i:
                pi = _poly_mul(pi, [float(j), 1.0])
        p = _poly_add(p, _poly_scale(pi, _LANCZOS_COEFS[i]))
    return tuple(reversed(p)), tuple(reversed(q))    # highest-degree first


_LANCZOS_P, _LANCZOS_Q = _lanczos_rational()


def _horner(z, coefs):       # coefs highest-degree first
    acc = jnp.full_like(z, coefs[0])
    for c in coefs[1:]:
        acc = acc * z + c
    return acc


def _lgamma(x):
    """log Gamma(x) for x > 0, elementwise.  1 divide + 2 logs per element."""
    z = x - 1.0
    # Clamp only the rational part: for z > 1e4 the Lanczos sum is ~1 + O(1/z)
    # and the clamp error (<3e-3 abs) is negligible vs lgamma(x) itself; this
    # keeps the degree-8 Horner intermediates (~z^8) well inside f32 range.
    zc = jnp.minimum(z, 1e4)
    a = _horner(zc, _LANCZOS_P) / _horner(zc, _LANCZOS_Q)
    t = z + _LANCZOS_G + 0.5
    return _HALF_LOG_2PI + (z + 0.5) * jnp.log(t) - t + jnp.log(a)


# ----------------------------------------------------------------------------
# Fused kernel: both modalities share one launch; grid axis = modality.
# Ref shapes below are per-modality (leading size-1 axis squeezed via None).
# ----------------------------------------------------------------------------
def _vae_kernel(x_ref, cnt_ref, sf_ref, logsf_ref, mask_ref,
                w1_ref, b1_ref, wmv_ref, bmv_ref,
                feat_ref, theta_ref, const_ref,
                codes_ref, recons_ref, stats_ref):
    # --- Encoder: Linear -> ReLU -> fused (mu | logvar) head -----------------
    x = x_ref[...]                                                   # (B, Dp)
    h = jnp.dot(x, w1_ref[...], preferred_element_type=jnp.float32) + b1_ref[...]
    h = jnp.maximum(h, 0.0)
    mv = jnp.dot(h, wmv_ref[...], preferred_element_type=jnp.float32) + bmv_ref[...]
    zdim = mv.shape[-1] // 2
    mu = mv[:, :zdim]
    logvar = mv[:, zdim:]
    codes_ref[...] = mu                                   # eval-mode reparametrize

    # --- NB factor decoder ----------------------------------------------------
    mask = mask_ref[...]                                             # (1, Dp) {0,1}
    logits = jnp.dot(mu, feat_ref[...], preferred_element_type=jnp.float32)
    logits = logits + (mask - 1.0) * 1e30                 # exclude padded features
    m = jnp.max(logits, axis=-1, keepdims=True)
    e = jnp.exp(logits - m)
    s = jnp.sum(e, axis=-1, keepdims=True)                           # (B, 1)
    inv_s = pl.reciprocal(s, approx=True)
    inv_s = inv_s * (2.0 - s * inv_s)                     # one Newton step (VPU, cheap)
    normalized = e * inv_s                                # softmax over features
    sf = sf_ref[...]                                                 # (B, 1)
    scale_x = sf * normalized
    recons_ref[...] = scale_x

    # --- log_nb_positive(X, scale_x, theta), summed over features -------------
    cnt = cnt_ref[...]
    theta = theta_ref[...]                                # (1, Dp) = exp(disp), hoisted
    log_theta_mu = jnp.log(theta + scale_x + _EPS)
    # log(scale_x + eps) rebuilt from the softmax pieces; clamp keeps the eps guard.
    log_scale_x = jnp.maximum(logsf_ref[...] + (logits - m) - jnp.log(s), _LOG_EPS)
    res = (const_ref[...]                                 # theta*log(theta+eps) - lgamma(theta)
           - (theta + cnt) * log_theta_mu
           + cnt * log_scale_x
           + _lgamma(cnt + theta)
           - _lgamma(cnt + 1.0))
    ll = jnp.sum(res * mask, axis=-1, keepdims=True)                 # (B, 1)

    # --- KL( q(z|x) || N(0, I) ) ----------------------------------------------
    kl = 0.5 * jnp.sum(jnp.exp(logvar) + mu * mu - logvar - 1.0,
                       axis=-1, keepdims=True)                       # (B, 1)

    # --- batch means packed into one lane-dense row: [mean_ll, mean_kl, 0 ...] -
    ll_mean = jnp.mean(ll, axis=0, keepdims=True)                    # (1, 1)
    kl_mean = jnp.mean(kl, axis=0, keepdims=True)                    # (1, 1)
    lane = lax.broadcasted_iota(jnp.int32, stats_ref.shape, dimension=1)
    stats_ref[...] = jnp.where(lane == 0, ll_mean,
                               jnp.where(lane == 1, kl_mean, 0.0))


# ----------------------------------------------------------------------------
# Wrapper: padding / stacking, parameter-only precompute, single pallas_call.
# ----------------------------------------------------------------------------
def _pad_last(a, target, value=0.0):
    pad = target - a.shape[-1]
    if pad == 0:
        return a
    cfg = [(0, 0)] * (a.ndim - 1) + [(0, pad)]
    return jnp.pad(a, cfg, constant_values=value)


def _prep_modality(x, counts, sf, params, d_pad):
    """Pads one modality to the common feature width and hoists parameter-only math."""
    w1, b1, wm, bm, wl, bl, feat, disp = params
    d = x.shape[-1]
    xp = _pad_last(x.astype(jnp.float32), d_pad)
    cp = _pad_last(counts.astype(jnp.float32), d_pad)
    sf = sf.astype(jnp.float32)
    log_sf = jnp.log(jnp.maximum(sf, _EPS))
    mask = _pad_last(jnp.ones((1, d), jnp.float32), d_pad)
    w1p = jnp.pad(w1, ((0, d_pad - d), (0, 0)))
    wmv = jnp.concatenate([wm, wl], axis=1)               # fused mu|logvar head
    bmv = jnp.concatenate([bm, bl], axis=1)
    featp = _pad_last(feat, d_pad)
    theta = jnp.exp(disp)                                 # (1, d)  parameter-only
    const = theta * jnp.log(theta + _EPS) - jax.scipy.special.gammaln(theta)
    thetap = _pad_last(theta, d_pad, value=1.0)           # keep lgamma args > 0 at pad
    constp = _pad_last(const, d_pad)
    return (xp, cp, sf, log_sf, mask, w1p, b1, wmv, bmv, featp, thetap, constp)


def _modality_spec(shape):
    n_rest = len(shape) - 1
    return pl.BlockSpec((None,) + tuple(shape[1:]),
                        lambda m: (m,) + (0,) * n_rest)


def vae_forward(rna_params, atac_params,
                rna_inputs, rna_X, rna_scale_factor,
                atac_inputs, atac_X, atac_scale_factor,
                rna_sigma=0.001, atac_sigma=1e-5, beta=1.0):
    # Assumes both encoders share the same hidden width and zdim (true for FactVAE
    # configs and the demo below); only the feature dims differ and get padded.
    gene_dim = rna_inputs.shape[-1]
    peak_dim = atac_inputs.shape[-1]
    d_pad = ((max(gene_dim, peak_dim) + 127) // 128) * 128
    B = rna_inputs.shape[0]
    zdim = rna_params[2].shape[1]

    rna_ops = _prep_modality(rna_inputs, rna_X, rna_scale_factor, rna_params, d_pad)
    atac_ops = _prep_modality(atac_inputs, atac_X, atac_scale_factor, atac_params, d_pad)
    operands = tuple(jnp.stack([r, a], axis=0) for r, a in zip(rna_ops, atac_ops))

    codes, recons, stats = pl.pallas_call(
        _vae_kernel,
        grid=(2,),
        in_specs=[_modality_spec(op.shape) for op in operands],
        out_specs=[_modality_spec((2, B, zdim)),
                   _modality_spec((2, B, d_pad)),
                   _modality_spec((2, 1, 128))],
        out_shape=(jax.ShapeDtypeStruct((2, B, zdim), jnp.float32),
                   jax.ShapeDtypeStruct((2, B, d_pad), jnp.float32),
                   jax.ShapeDtypeStruct((2, 1, 128), jnp.float32)),
        compiler_params=pltpu.CompilerParams(
            dimension_semantics=("parallel",)),   # modalities independent; 2 TCs on v7x
    )(*operands)

    rna_codes, atac_codes = codes[0], codes[1]
    rna_recons = recons[0, :, :gene_dim]
    atac_recons = recons[1, :, :peak_dim]
    rna_mse, rna_kl = stats[0, 0, 0], stats[0, 0, 1]
    atac_mse, atac_kl = stats[1, 0, 0], stats[1, 0, 1]

    rna_loss = rna_sigma * rna_mse + beta * rna_kl
    atac_loss = atac_sigma * atac_mse + beta * atac_kl
    return (rna_loss, (rna_mse, rna_kl), (rna_codes, rna_recons),
            atac_loss, (atac_mse, atac_kl), (atac_codes, atac_recons))


# ----------------------------------------------------------------------------
# Deterministic parameter initialization (xavier_normal on weight matrices).
# ----------------------------------------------------------------------------
def _xavier_normal(key, fan_in, fan_out, shape):
    std = (2.0 / (fan_in + fan_out)) ** 0.5
    return std * jax.random.normal(key, shape, dtype=jnp.float32)


def init_modality_params(key, in_dim, hidden, zdim, out_dim):
    ks = jax.random.split(key, 5)
    w1 = _xavier_normal(ks[0], in_dim, hidden, (in_dim, hidden))   # encoder layer
    b1 = jnp.zeros((1, hidden), jnp.float32)
    wm = _xavier_normal(ks[1], hidden, zdim, (hidden, zdim))       # fc_means
    bm = jnp.zeros((1, zdim), jnp.float32)
    wl = _xavier_normal(ks[2], hidden, zdim, (hidden, zdim))       # fc_logvar
    bl = jnp.zeros((1, zdim), jnp.float32)
    feat = _xavier_normal(ks[3], zdim, out_dim, (zdim, out_dim))   # decoder.feature
    disp = _xavier_normal(ks[4], 1, out_dim, (1, out_dim))         # decoder dispersion
    return (w1, b1, wm, bm, wl, bl, feat, disp)


if __name__ == "__main__":
    key = jax.random.PRNGKey(0)
    B, gene_dim, peak_dim, hidden, zdim = 8, 256, 384, 64, 32

    k_rp, k_ap, k_rc, k_ac = jax.random.split(key, 4)
    rna_params = init_modality_params(k_rp, gene_dim, hidden, zdim, gene_dim)
    atac_params = init_modality_params(k_ap, peak_dim, hidden, zdim, peak_dim)

    # Synthetic count data; inputs are log1p-normalized counts.
    rna_X = jnp.floor(5.0 * jax.random.uniform(k_rc, (B, gene_dim))).astype(jnp.float32)
    atac_X = jnp.floor(2.0 * jax.random.uniform(k_ac, (B, peak_dim))).astype(jnp.float32)
    rna_inputs = jnp.log1p(rna_X)
    atac_inputs = jnp.log1p(atac_X)
    rna_scale_factor = jnp.sum(rna_X, axis=1, keepdims=True)    # (B, 1) library size
    atac_scale_factor = jnp.sum(atac_X, axis=1, keepdims=True)  # (B, 1)

    fwd = jax.jit(vae_forward)
    out = fwd(rna_params, atac_params,
              rna_inputs, rna_X, rna_scale_factor,
              atac_inputs, atac_X, atac_scale_factor)
    out = jax.block_until_ready(out)

    (rna_loss, (rna_mse, rna_kl), (rna_codes, rna_recons),
     atac_loss, (atac_mse, atac_kl), (atac_codes, atac_recons)) = out
    assert rna_codes.shape == (B, zdim) and rna_recons.shape == (B, gene_dim)
    assert atac_codes.shape == (B, zdim) and atac_recons.shape == (B, peak_dim)
    assert jnp.isfinite(rna_loss) and jnp.isfinite(atac_loss)
    assert jnp.isfinite(rna_mse) and jnp.isfinite(rna_kl)
    assert jnp.isfinite(atac_mse) and jnp.isfinite(atac_kl)
    print("KERNEL_OK")
</pallas_src>

<mosaic_0001>
module attributes {stable_mosaic.version = 11 : i64} {
  func.func @_vae_kernel(%arg0: i32, %arg1: memref<1x8x384xf32, #tpu.memory_space<vmem>>, %arg2: memref<1x8x384xf32, #tpu.memory_space<vmem>>, %arg3: memref<1x8x1xf32, #tpu.memory_space<vmem>>, %arg4: memref<1x8x1xf32, #tpu.memory_space<vmem>>, %arg5: memref<1x1x384xf32, #tpu.memory_space<vmem>>, %arg6: memref<1x384x64xf32, #tpu.memory_space<vmem>>, %arg7: memref<1x1x64xf32, #tpu.memory_space<vmem>>, %arg8: memref<1x64x64xf32, #tpu.memory_space<vmem>>, %arg9: memref<1x1x64xf32, #tpu.memory_space<vmem>>, %arg10: memref<1x32x384xf32, #tpu.memory_space<vmem>>, %arg11: memref<1x1x384xf32, #tpu.memory_space<vmem>>, %arg12: memref<1x1x384xf32, #tpu.memory_space<vmem>>, %arg13: memref<1x8x32xf32, #tpu.memory_space<vmem>>, %arg14: memref<1x8x384xf32, #tpu.memory_space<vmem>>, %arg15: memref<1x1x128xf32, #tpu.memory_space<vmem>>) attributes {dimension_semantics = [#tpu.dimension_semantics<parallel>], iteration_bounds = array<i64: 2>, scalar_prefetch = 0 : i64, scratch_operands = 0 : i64, tpu.core_type = #tpu.core_type<tc>, window_params = [{transform_indices = @transform_0, window_bounds = array<i64: 1, 8, 384>}, {transform_indices = @transform_1, window_bounds = array<i64: 1, 8, 384>}, {transform_indices = @transform_2, window_bounds = array<i64: 1, 8, 1>}, {transform_indices = @transform_3, window_bounds = array<i64: 1, 8, 1>}, {transform_indices = @transform_4, window_bounds = array<i64: 1, 1, 384>}, {transform_indices = @transform_5, window_bounds = array<i64: 1, 384, 64>}, {transform_indices = @transform_6, window_bounds = array<i64: 1, 1, 64>}, {transform_indices = @transform_7, window_bounds = array<i64: 1, 64, 64>}, {transform_indices = @transform_8, window_bounds = array<i64: 1, 1, 64>}, {transform_indices = @transform_9, window_bounds = array<i64: 1, 32, 384>}, {transform_indices = @transform_10, window_bounds = array<i64: 1, 1, 384>}, {transform_indices = @transform_11, window_bounds = array<i64: 1, 1, 384>}, {transform_indices = @transform_12, window_bounds = array<i64: 1, 8, 32>}, {transform_indices = @transform_13, window_bounds = array<i64: 1, 8, 384>}, {transform_indices = @transform_14, window_bounds = array<i64: 1, 1, 128>}]} {
    %c0 = arith.constant 0 : index
    %c0_0 = arith.constant 0 : index
    %c0_1 = arith.constant 0 : index
    %0 = vector.load %arg1[%c0, %c0_0, %c0_1] : memref<1x8x384xf32, #tpu.memory_space<vmem>>, vector<1x8x384xf32>
    %1 = vector.shape_cast %0 : vector<1x8x384xf32> to vector<8x384xf32>
    %c0_2 = arith.constant 0 : index
    %c0_3 = arith.constant 0 : index
    %c0_4 = arith.constant 0 : index
    %2 = vector.load %arg6[%c0_2, %c0_3, %c0_4] : memref<1x384x64xf32, #tpu.memory_space<vmem>>, vector<1x384x64xf32>
    %3 = vector.shape_cast %2 : vector<1x384x64xf32> to vector<384x64xf32>
    %cst = arith.constant dense<0.000000e+00> : vector<8x64xf32>
    %4 = tpu.matmul %1, %3, %cst {dimension_numbers = #tpu.dot_dimension_numbers<[1], [0], [0], [1], [0, 0, 1, 1], [], []>} : vector<8x384xf32>, vector<384x64xf32>, vector<8x64xf32> -> vector<8x64xf32>
    %c0_5 = arith.constant 0 : index
    %c0_6 = arith.constant 0 : index
    %c0_7 = arith.constant 0 : index
    %5 = vector.load %arg7[%c0_5, %c0_6, %c0_7] : memref<1x1x64xf32, #tpu.memory_space<vmem>>, vector<1x1x64xf32>
    %6 = vector.shape_cast %5 : vector<1x1x64xf32> to vector<1x64xf32>
    %7 = vector.broadcast %6 : vector<1x64xf32> to vector<8x64xf32>
    %8 = arith.addf %4, %7 : vector<8x64xf32>
    %cst_8 = arith.constant 0.000000e+00 : f32
    %9 = vector.broadcast %cst_8 : f32 to vector<8x64xf32>
    %10 = arith.maximumf %8, %9 : vector<8x64xf32>
    %c0_9 = arith.constant 0 : index
    %c0_10 = arith.constant 0 : index
    %c0_11 = arith.constant 0 : index
    %11 = vector.load %arg8[%c0_9, %c0_10, %c0_11] : memref<1x64x64xf32, #tpu.memory_space<vmem>>, vector<1x64x64xf32>
    %12 = vector.shape_cast %11 : vector<1x64x64xf32> to vector<64x64xf32>
    %cst_12 = arith.constant dense<0.000000e+00> : vector<8x64xf32>
    %13 = tpu.matmul %10, %12, %cst_12 {dimension_numbers = #tpu.dot_dimension_numbers<[1], [0], [0], [1], [0, 0, 1, 1], [], []>} : vector<8x64xf32>, vector<64x64xf32>, vector<8x64xf32> -> vector<8x64xf32>
    %c0_13 = arith.constant 0 : index
    %c0_14 = arith.constant 0 : index
    %c0_15 = arith.constant 0 : index
    %14 = vector.load %arg9[%c0_13, %c0_14, %c0_15] : memref<1x1x64xf32, #tpu.memory_space<vmem>>, vector<1x1x64xf32>
    %15 = vector.shape_cast %14 : vector<1x1x64xf32> to vector<1x64xf32>
    %16 = vector.broadcast %15 : vector<1x64xf32> to vector<8x64xf32>
    %17 = arith.addf %13, %16 : vector<8x64xf32>
    %18 = vector.extract_strided_slice %17 {offsets = [0, 0], sizes = [8, 32], strides = [1, 1]} : vector<8x64xf32> to vector<8x32xf32>
    %19 = vector.extract_strided_slice %17 {offsets = [0, 32], sizes = [8, 32], strides = [1, 1]} : vector<8x64xf32> to vector<8x32xf32>
    %c0_16 = arith.constant 0 : index
    %c0_17 = arith.constant 0 : index
    %c0_18 = arith.constant 0 : index
    %20 = vector.load %arg13[%c0_16, %c0_17, %c0_18] : memref<1x8x32xf32, #tpu.memory_space<vmem>>, vector<1x8x32xf32>
    %21 = vector.shape_cast %20 : vector<1x8x32xf32> to vector<8x32xf32>
    %22 = vector.shape_cast %18 : vector<8x32xf32> to vector<1x8x32xf32>
    tpu.vector_store %arg13[%c0_16, %c0_17, %c0_18], %22 {strides = array<i32>} : memref<1x8x32xf32, #tpu.memory_space<vmem>>, vector<1x8x32xf32>,
    %c0_19 = arith.constant 0 : index
    %c0_20 = arith.constant 0 : index
    %c0_21 = arith.constant 0 : index
    %23 = vector.load %arg5[%c0_19, %c0_20, %c0_21] : memref<1x1x384xf32, #tpu.memory_space<vmem>>, vector<1x1x384xf32>
    %24 = vector.shape_cast %23 : vector<1x1x384xf32> to vector<1x384xf32>
    %c0_22 = arith.constant 0 : index
    %c0_23 = arith.constant 0 : index
    %c0_24 = arith.constant 0 : index
    %25 = vector.load %arg10[%c0_22, %c0_23, %c0_24] : memref<1x32x384xf32, #tpu.memory_space<vmem>>, vector<1x32x384xf32>
    %26 = vector.shape_cast %25 : vector<1x32x384xf32> to vector<32x384xf32>
    %cst_25 = arith.constant dense<0.000000e+00> : vector<8x384xf32>
    %27 = tpu.matmul %18, %26, %cst_25 {dimension_numbers = #tpu.dot_dimension_numbers<[1], [0], [0], [1], [0, 0, 1, 1], [], []>} : vector<8x32xf32>, vector<32x384xf32>, vector<8x384xf32> -> vector<8x384xf32>
    %cst_26 = arith.constant 1.000000e+00 : f32
    %28 = vector.broadcast %cst_26 : f32 to vector<1x384xf32>
    %29 = arith.subf %24, %28 : vector<1x384xf32>
    %cst_27 = arith.constant 1.000000e+30 : f32
    %30 = vector.broadcast %cst_27 : f32 to vector<1x384xf32>
    %31 = arith.mulf %29, %30 : vector<1x384xf32>
    %32 = vector.broadcast %31 : vector<1x384xf32> to vector<8x384xf32>
    %33 = arith.addf %27, %32 : vector<8x384xf32>
    %cst_28 = arith.constant dense<0xFF800000> : vector<8xf32>
    %34 = vector.multi_reduction <maximumf>, %33, %cst_28 [1] : vector<8x384xf32> to vector<8xf32>
    %35 = vector.shape_cast %34 : vector<8xf32> to vector<8x1xf32>
    %36 = vector.broadcast %35 : vector<8x1xf32> to vector<8x384xf32>
    %37 = arith.subf %33, %36 : vector<8x384xf32>
    %38 = math.exp %37 : vector<8x384xf32>
    %cst_29 = arith.constant dense<0.000000e+00> : vector<8xf32>
    %39 = vector.multi_reduction <add>, %38, %cst_29 [1] : vector<8x384xf32> to vector<8xf32>
    %40 = vector.shape_cast %39 : vector<8xf32> to vector<8x1xf32>
    %41 = tpu.reciprocal %40 {approx = true} : vector<8x1xf32> -> vector<8x1xf32>
    %42 = arith.mulf %40, %41 : vector<8x1xf32>
    %cst_30 = arith.constant 2.000000e+00 : f32
    %43 = vector.broadcast %cst_30 : f32 to vector<8x1xf32>
    %44 = arith.subf %43, %42 : vector<8x1xf32>
    %45 = arith.mulf %41, %44 : vector<8x1xf32>
    %46 = vector.broadcast %45 : vector<8x1xf32> to vector<8x384xf32>
    %47 = arith.mulf %38, %46 : vector<8x384xf32>
    %c0_31 = arith.constant 0 : index
    %c0_32 = arith.constant 0 : index
    %c0_33 = arith.constant 0 : index
    %48 = vector.load %arg3[%c0_31, %c0_32, %c0_33] : memref<1x8x1xf32, #tpu.memory_space<vmem>>, vector<1x8x1xf32>
    %49 = vector.shape_cast %48 : vector<1x8x1xf32> to vector<8x1xf32>
    %50 = vector.broadcast %49 : vector<8x1xf32> to vector<8x384xf32>
    %51 = arith.mulf %50, %47 : vector<8x384xf32>
    %c0_34 = arith.constant 0 : index
    %c0_35 = arith.constant 0 : index
    %c0_36 = arith.constant 0 : index
    %52 = vector.load %arg14[%c0_34, %c0_35, %c0_36] : memref<1x8x384xf32, #tpu.memory_space<vmem>>, vector<1x8x384xf32>
    %53 = vector.shape_cast %52 : vector<1x8x384xf32> to vector<8x384xf32>
    %54 = vector.shape_cast %51 : vector<8x384xf32> to vector<1x8x384xf32>
    tpu.vector_store %arg14[%c0_34, %c0_35, %c0_36], %54 {strides = array<i32>} : memref<1x8x384xf32, #tpu.memory_space<vmem>>, vector<1x8x384xf32>,
    %c0_37 = arith.constant 0 : index
    %c0_38 = arith.constant 0 : index
    %c0_39 = arith.constant 0 : index
    %55 = vector.load %arg2[%c0_37, %c0_38, %c0_39] : memref<1x8x384xf32, #tpu.memory_space<vmem>>, vector<1x8x384xf32>
    %56 = vector.shape_cast %55 : vector<1x8x384xf32> to vector<8x384xf32>
    %c0_40 = arith.constant 0 : index
    %c0_41 = arith.constant 0 : index
    %c0_42 = arith.constant 0 : index
    %57 = vector.load %arg11[%c0_40, %c0_41, %c0_42] : memref<1x1x384xf32, #tpu.memory_space<vmem>>, vector<1x1x384xf32>
    %58 = vector.shape_cast %57 : vector<1x1x384xf32> to vector<1x384xf32>
    %59 = vector.broadcast %58 : vector<1x384xf32> to vector<8x384xf32>
    %60 = arith.addf %59, %51 : vector<8x384xf32>
    %cst_43 = arith.constant 9.99999993E-9 : f32
    %61 = vector.broadcast %cst_43 : f32 to vector<8x384xf32>
    %62 = arith.addf %60, %61 : vector<8x384xf32>
    %63 = math.log %62 : vector<8x384xf32>
    %c0_44 = arith.constant 0 : index
    %c0_45 = arith.constant 0 : index
    %c0_46 = arith.constant 0 : index
    %64 = vector.load %arg4[%c0_44, %c0_45, %c0_46] : memref<1x8x1xf32, #tpu.memory_space<vmem>>, vector<1x8x1xf32>
    %65 = vector.shape_cast %64 : vector<1x8x1xf32> to vector<8x1xf32>
    %66 = vector.broadcast %35 : vector<8x1xf32> to vector<8x384xf32>
    %67 = arith.subf %33, %66 : vector<8x384xf32>
    %68 = vector.broadcast %65 : vector<8x1xf32> to vector<8x384xf32>
    %69 = arith.addf %68, %67 : vector<8x384xf32>
    %70 = math.log %40 : vector<8x1xf32>
    %71 = vector.broadcast %70 : vector<8x1xf32> to vector<8x384xf32>
    %72 = arith.subf %69, %71 : vector<8x384xf32>
    %cst_47 = arith.constant -18.420681 : f32
    %73 = vector.broadcast %cst_47 : f32 to vector<8x384xf32>
    %74 = arith.maximumf %72, %73 : vector<8x384xf32>
    %c0_48 = arith.constant 0 : index
    %c0_49 = arith.constant 0 : index
    %c0_50 = arith.constant 0 : index
    %75 = vector.load %arg12[%c0_48, %c0_49, %c0_50] : memref<1x1x384xf32, #tpu.memory_space<vmem>>, vector<1x1x384xf32>
    %76 = vector.shape_cast %75 : vector<1x1x384xf32> to vector<1x384xf32>
    %77 = vector.broadcast %58 : vector<1x384xf32> to vector<8x384xf32>
    %78 = arith.addf %77, %56 : vector<8x384xf32>
    %79 = arith.mulf %78, %63 : vector<8x384xf32>
    %80 = vector.broadcast %76 : vector<1x384xf32> to vector<8x384xf32>
    %81 = arith.subf %80, %79 : vector<8x384xf32>
    %82 = arith.mulf %56, %74 : vector<8x384xf32>
    %83 = arith.addf %81, %82 : vector<8x384xf32>
    %84 = vector.broadcast %58 : vector<1x384xf32> to vector<8x384xf32>
    %85 = arith.addf %56, %84 : vector<8x384xf32>
    %cst_51 = arith.constant 1.000000e+00 : f32
    %86 = vector.broadcast %cst_51 : f32 to vector<8x384xf32>
    %87 = arith.subf %85, %86 : vector<8x384xf32>
    %cst_52 = arith.constant 1.000000e+04 : f32
    %88 = vector.broadcast %cst_52 : f32 to vector<8x384xf32>
    %89 = arith.minimumf %87, %88 : vector<8x384xf32>
    %cst_53 = arith.constant 1.000000e+00 : f32
    %90 = vector.broadcast %cst_53 : f32 to vector<8x384xf32>
    %91 = arith.mulf %90, %89 : vector<8x384xf32>
    %cst_54 = arith.constant 60.4583321 : f32
    %92 = vector.broadcast %cst_54 : f32 to vector<8x384xf32>
    %93 = arith.addf %91, %92 : vector<8x384xf32>
    %94 = arith.mulf %93, %89 : vector<8x384xf32>
    %cst_55 = arith.constant 1599.04248 : f32
    %95 = vector.broadcast %cst_55 : f32 to vector<8x384xf32>
    %96 = arith.addf %94, %95 : vector<8x384xf32>
    %97 = arith.mulf %96, %89 : vector<8x384xf32>
    %cst_56 = arith.constant 24165.5098 : f32
    %98 = vector.broadcast %cst_56 : f32 to vector<8x384xf32>
    %99 = arith.addf %97, %98 : vector<8x384xf32>
    %100 = arith.mulf %99, %89 : vector<8x384xf32>
    %cst_57 = arith.constant 228235.219 : f32
    %101 = vector.broadcast %cst_57 : f32 to vector<8x384xf32>
    %102 = arith.addf %100, %101 : vector<8x384xf32>
    %103 = arith.mulf %102, %89 : vector<8x384xf32>
    %cst_58 = arith.constant 1379496.25 : f32
    %104 = vector.broadcast %cst_58 : f32 to vector<8x384xf32>
    %105 = arith.addf %103, %104 : vector<8x384xf32>
    %106 = arith.mulf %105, %89 : vector<8x384xf32>
    %cst_59 = arith.constant 0x4A9F05EA : f32
    %107 = vector.broadcast %cst_59 : f32 to vector<8x384xf32>
    %108 = arith.addf %106, %107 : vector<8x384xf32>
    %109 = arith.mulf %108, %89 : vector<8x384xf32>
    %cst_60 = arith.constant 0x4B2B9D51 : f32
    %110 = vector.broadcast %cst_60 : f32 to vector<8x384xf32>
    %111 = arith.addf %109, %110 : vector<8x384xf32>
    %112 = arith.mulf %111, %89 : vector<8x384xf32>
    %cst_61 = arith.constant 0x4B220ADA : f32
    %113 = vector.broadcast %cst_61 : f32 to vector<8x384xf32>
    %114 = arith.addf %112, %113 : vector<8x384xf32>
    %cst_62 = arith.constant 1.000000e+00 : f32
    %115 = vector.broadcast %cst_62 : f32 to vector<8x384xf32>
    %116 = arith.mulf %115, %89 : vector<8x384xf32>
    %cst_63 = arith.constant 3.600000e+01 : f32
    %117 = vector.broadcast %cst_63 : f32 to vector<8x384xf32>
    %118 = arith.addf %116, %117 : vector<8x384xf32>
    %119 = arith.mulf %118, %89 : vector<8x384xf32>
    %cst_64 = arith.constant 5.460000e+02 : f32
    %120 = vector.broadcast %cst_64 : f32 to vector<8x384xf32>
    %121 = arith.addf %119, %120 : vector<8x384xf32>
    %122 = arith.mulf %121, %89 : vector<8x384xf32>
    %cst_65 = arith.constant 4.536000e+03 : f32
    %123 = vector.broadcast %cst_65 : f32 to vector<8x384xf32>
    %124 = arith.addf %122, %123 : vector<8x384xf32>
    %125 = arith.mulf %124, %89 : vector<8x384xf32>
    %cst_66 = arith.constant 2.244900e+04 : f32
    %126 = vector.broadcast %cst_66 : f32 to vector<8x384xf32>
    %127 = arith.addf %125, %126 : vector<8x384xf32>
    %128 = arith.mulf %127, %89 : vector<8x384xf32>
    %cst_67 = arith.constant 6.728400e+04 : f32
    %129 = vector.broadcast %cst_67 : f32 to vector<8x384xf32>
    %130 = arith.addf %128, %129 : vector<8x384xf32>
    %131 = arith.mulf %130, %89 : vector<8x384xf32>
    %cst_68 = arith.constant 1.181240e+05 : f32
    %132 = vector.broadcast %cst_68 : f32 to vector<8x384xf32>
    %133 = arith.addf %131, %132 : vector<8x384xf32>
    %134 = arith.mulf %133, %89 : vector<8x384xf32>
    %cst_69 = arith.constant 1.095840e+05 : f32
    %135 = vector.broadcast %cst_69 : f32 to vector<8x384xf32>
    %136 = arith.addf %134, %135 : vector<8x384xf32>
    %137 = arith.mulf %136, %89 : vector<8x384xf32>
    %cst_70 = arith.constant 4.032000e+04 : f32
    %138 = vector.broadcast %cst_70 : f32 to vector<8x384xf32>
    %139 = arith.addf %137, %138 : vector<8x384xf32>
    %140 = arith.divf %114, %139 : vector<8x384xf32>
    %cst_71 = arith.constant 7.000000e+00 : f32
    %141 = vector.broadcast %cst_71 : f32 to vector<8x384xf32>
    %142 = arith.addf %87, %141 : vector<8x384xf32>
    %cst_72 = arith.constant 5.000000e-01 : f32
    %143 = vector.broadcast %cst_72 : f32 to vector<8x384xf32>
    %144 = arith.addf %142, %143 : vector<8x384xf32>
    %cst_73 = arith.constant 5.000000e-01 : f32
    %145 = vector.broadcast %cst_73 : f32 to vector<8x384xf32>
    %146 = arith.addf %87, %145 : vector<8x384xf32>
    %147 = math.log %144 : vector<8x384xf32>
    %148 = arith.mulf %146, %147 : vector<8x384xf32>
    %cst_74 = arith.constant 0.918938517 : f32
    %149 = vector.broadcast %cst_74 : f32 to vector<8x384xf32>
    %150 = arith.addf %149, %148 : vector<8x384xf32>
    %151 = arith.subf %150, %144 : vector<8x384xf32>
    %152 = math.log %140 : vector<8x384xf32>
    %153 = arith.addf %151, %152 : vector<8x384xf32>
    %154 = arith.addf %83, %153 : vector<8x384xf32>
    %cst_75 = arith.constant 1.000000e+00 : f32
    %155 = vector.broadcast %cst_75 : f32 to vector<8x384xf32>
    %156 = arith.addf %56, %155 : vector<8x384xf32>
    %cst_76 = arith.constant 1.000000e+00 : f32
    %157 = vector.broadcast %cst_76 : f32 to vector<8x384xf32>
    %158 = arith.subf %156, %157 : vector<8x384xf32>
    %cst_77 = arith.constant 1.000000e+04 : f32
    %159 = vector.broadcast %cst_77 : f32 to vector<8x384xf32>
    %160 = arith.minimumf %158, %159 : vector<8x384xf32>
    %cst_78 = arith.constant 1.000000e+00 : f32
    %161 = vector.broadcast %cst_78 : f32 to vector<8x384xf32>
    %162 = arith.mulf %161, %160 : vector<8x384xf32>
    %cst_79 = arith.constant 60.4583321 : f32
    %163 = vector.broadcast %cst_79 : f32 to vector<8x384xf32>
    %164 = arith.addf %162, %163 : vector<8x384xf32>
    %165 = arith.mulf %164, %160 : vector<8x384xf32>
    %cst_80 = arith.constant 1599.04248 : f32
    %166 = vector.broadcast %cst_80 : f32 to vector<8x384xf32>
    %167 = arith.addf %165, %166 : vector<8x384xf32>
    %168 = arith.mulf %167, %160 : vector<8x384xf32>
    %cst_81 = arith.constant 24165.5098 : f32
    %169 = vector.broadcast %cst_81 : f32 to vector<8x384xf32>
    %170 = arith.addf %168, %169 : vector<8x384xf32>
    %171 = arith.mulf %170, %160 : vector<8x384xf32>
    %cst_82 = arith.constant 228235.219 : f32
    %172 = vector.broadcast %cst_82 : f32 to vector<8x384xf32>
    %173 = arith.addf %171, %172 : vector<8x384xf32>
    %174 = arith.mulf %173, %160 : vector<8x384xf32>
    %cst_83 = arith.constant 1379496.25 : f32
    %175 = vector.broadcast %cst_83 : f32 to vector<8x384xf32>
    %176 = arith.addf %174, %175 : vector<8x384xf32>
    %177 = arith.mulf %176, %160 : vector<8x384xf32>
    %cst_84 = arith.constant 0x4A9F05EA : f32
    %178 = vector.broadcast %cst_84 : f32 to vector<8x384xf32>
    %179 = arith.addf %177, %178 : vector<8x384xf32>
    %180 = arith.mulf %179, %160 : vector<8x384xf32>
    %cst_85 = arith.constant 0x4B2B9D51 : f32
    %181 = vector.broadcast %cst_85 : f32 to vector<8x384xf32>
    %182 = arith.addf %180, %181 : vector<8x384xf32>
    %183 = arith.mulf %182, %160 : vector<8x384xf32>
    %cst_86 = arith.constant 0x4B220ADA : f32
    %184 = vector.broadcast %cst_86 : f32 to vector<8x384xf32>
    %185 = arith.addf %183, %184 : vector<8x384xf32>
    %cst_87 = arith.constant 1.000000e+00 : f32
    %186 = vector.broadcast %cst_87 : f32 to vector<8x384xf32>
    %187 = arith.mulf %186, %160 : vector<8x384xf32>
    %cst_88 = arith.constant 3.600000e+01 : f32
    %188 = vector.broadcast %cst_88 : f32 to vector<8x384xf32>
    %189 = arith.addf %187, %188 : vector<8x384xf32>
    %190 = arith.mulf %189, %160 : vector<8x384xf32>
    %cst_89 = arith.constant 5.460000e+02 : f32
    %191 = vector.broadcast %cst_89 : f32 to vector<8x384xf32>
    %192 = arith.addf %190, %191 : vector<8x384xf32>
    %193 = arith.mulf %192, %160 : vector<8x384xf32>
    %cst_90 = arith.constant 4.536000e+03 : f32
    %194 = vector.broadcast %cst_90 : f32 to vector<8x384xf32>
    %195 = arith.addf %193, %194 : vector<8x384xf32>
    %196 = arith.mulf %195, %160 : vector<8x384xf32>
    %cst_91 = arith.constant 2.244900e+04 : f32
    %197 = vector.broadcast %cst_91 : f32 to vector<8x384xf32>
    %198 = arith.addf %196, %197 : vector<8x384xf32>
    %199 = arith.mulf %198, %160 : vector<8x384xf32>
    %cst_92 = arith.constant 6.728400e+04 : f32
    %200 = vector.broadcast %cst_92 : f32 to vector<8x384xf32>
    %201 = arith.addf %199, %200 : vector<8x384xf32>
    %202 = arith.mulf %201, %160 : vector<8x384xf32>
    %cst_93 = arith.constant 1.181240e+05 : f32
    %203 = vector.broadcast %cst_93 : f32 to vector<8x384xf32>
    %204 = arith.addf %202, %203 : vector<8x384xf32>
    %205 = arith.mulf %204, %160 : vector<8x384xf32>
    %cst_94 = arith.constant 1.095840e+05 : f32
    %206 = vector.broadcast %cst_94 : f32 to vector<8x384xf32>
    %207 = arith.addf %205, %206 : vector<8x384xf32>
    %208 = arith.mulf %207, %160 : vector<8x384xf32>
    %cst_95 = arith.constant 4.032000e+04 : f32
    %209 = vector.broadcast %cst_95 : f32 to vector<8x384xf32>
    %210 = arith.addf %208, %209 : vector<8x384xf32>
    %211 = arith.divf %185, %210 : vector<8x384xf32>
    %cst_96 = arith.constant 7.000000e+00 : f32
    %212 = vector.broadcast %cst_96 : f32 to vector<8x384xf32>
    %213 = arith.addf %158, %212 : vector<8x384xf32>
    %cst_97 = arith.constant 5.000000e-01 : f32
    %214 = vector.broadcast %cst_97 : f32 to vector<8x384xf32>
    %215 = arith.addf %213, %214 : vector<8x384xf32>
    %cst_98 = arith.constant 5.000000e-01 : f32
    %216 = vector.broadcast %cst_98 : f32 to vector<8x384xf32>
    %217 = arith.addf %158, %216 : vector<8x384xf32>
    %218 = math.log %215 : vector<8x384xf32>
    %219 = arith.mulf %217, %218 : vector<8x384xf32>
    %cst_99 = arith.constant 0.918938517 : f32
    %220 = vector.broadcast %cst_99 : f32 to vector<8x384xf32>
    %221 = arith.addf %220, %219 : vector<8x384xf32>
    %222 = arith.subf %221, %215 : vector<8x384xf32>
    %223 = math.log %211 : vector<8x384xf32>
    %224 = arith.addf %222, %223 : vector<8x384xf32>
    %225 = arith.subf %154, %224 : vector<8x384xf32>
    %226 = vector.broadcast %24 : vector<1x384xf32> to vector<8x384xf32>
    %227 = arith.mulf %225, %226 : vector<8x384xf32>
    %cst_100 = arith.constant dense<0.000000e+00> : vector<8xf32>
    %228 = vector.multi_reduction <add>, %227, %cst_100 [1] : vector<8x384xf32> to vector<8xf32>
    %229 = vector.shape_cast %228 : vector<8xf32> to vector<8x1xf32>
    %230 = math.exp %19 : vector<8x32xf32>
    %231 = arith.mulf %18, %18 : vector<8x32xf32>
    %232 = arith.addf %230, %231 : vector<8x32xf32>
    %233 = arith.subf %232, %19 : vector<8x32xf32>
    %cst_101 = arith.constant 1.000000e+00 : f32
    %234 = vector.broadcast %cst_101 : f32 to vector<8x32xf32>
    %235 = arith.subf %233, %234 : vector<8x32xf32>
    %cst_102 = arith.constant dense<0.000000e+00> : vector<8xf32>
    %236 = vector.multi_reduction <add>, %235, %cst_102 [1] : vector<8x32xf32> to vector<8xf32>
    %237 = vector.shape_cast %236 : vector<8xf32> to vector<8x1xf32>
    %cst_103 = arith.constant 5.000000e-01 : f32
    %238 = vector.broadcast %cst_103 : f32 to vector<8x1xf32>
    %239 = arith.mulf %238, %237 : vector<8x1xf32>
    %cst_104 = arith.constant dense<0.000000e+00> : vector<1xf32>
    %240 = vector.multi_reduction <add>, %229, %cst_104 [0] : vector<8x1xf32> to vector<1xf32>
    %241 = vector.shape_cast %240 : vector<1xf32> to vector<1x1xf32>
    %cst_105 = arith.constant 8.000000e+00 : f32
    %242 = vector.broadcast %cst_105 : f32 to vector<1x1xf32>
    %243 = arith.divf %241, %242 : vector<1x1xf32>
    %cst_106 = arith.constant dense<0.000000e+00> : vector<1xf32>
    %244 = vector.multi_reduction <add>, %239, %cst_106 [0] : vector<8x1xf32> to vector<1xf32>
    %245 = vector.shape_cast %244 : vector<1xf32> to vector<1x1xf32>
    %cst_107 = arith.constant 8.000000e+00 : f32
    %246 = vector.broadcast %cst_107 : f32 to vector<1x1xf32>
    %247 = arith.divf %245, %246 : vector<1x1xf32>
    %248 = tpu.iota {dimensions = array<i32: 1>} : vector<1x128xi32>
    %c0_i32 = arith.constant 0 : i32
    %249 = vector.broadcast %c0_i32 : i32 to vector<1x128xi32>
    %250 = arith.cmpi eq, %248, %249 : vector<1x128xi32>
    %c1_i32 = arith.constant 1 : i32
    %251 = vector.broadcast %c1_i32 : i32 to vector<1x128xi32>
    %252 = arith.cmpi eq, %248, %251 : vector<1x128xi32>
    %cst_108 = arith.constant 0.000000e+00 : f32
    %253 = vector.shape_cast %247 : vector<1x1xf32> to vector<1x1xf32>
    %254 = vector.broadcast %253 : vector<1x1xf32> to vector<1x128xf32>
    %255 = vector.broadcast %cst_108 : f32 to vector<1x128xf32>
    %256 = arith.select %252, %254, %255 : vector<1x128xi1>, vector<1x128xf32>
    %257 = vector.shape_cast %243 : vector<1x1xf32> to vector<1x1xf32>
    %258 = vector.broadcast %257 : vector<1x1xf32> to vector<1x128xf32>
    %259 = arith.select %250, %258, %256 : vector<1x128xi1>, vector<1x128xf32>
    %c0_109 = arith.constant 0 : index
    %c0_110 = arith.constant 0 : index
    %c0_111 = arith.constant 0 : index
    %260 = vector.load %arg15[%c0_109, %c0_110, %c0_111] : memref<1x1x128xf32, #tpu.memory_space<vmem>>, vector<1x1x128xf32>
    %261 = vector.shape_cast %260 : vector<1x1x128xf32> to vector<1x128xf32>
    %262 = vector.shape_cast %259 : vector<1x128xf32> to vector<1x1x128xf32>
    tpu.vector_store %arg15[%c0_109, %c0_110, %c0_111], %262 {strides = array<i32>} : memref<1x1x128xf32, #tpu.memory_space<vmem>>, vector<1x1x128xf32>,
    return
  }
  func.func @transform_0(%arg0: i32) -> (i32, i32, i32) {
    %c0_i32 = arith.constant 0 : i32
    %c0_i32_0 = arith.constant 0 : i32
    %c0_i32_1 = arith.constant 0 : i32
    return %arg0, %c0_i32, %c0_i32_0 : i32, i32, i32
  }
  func.func @transform_1(%arg0: i32) -> (i32, i32, i32) {
    %c0_i32 = arith.constant 0 : i32
    %c0_i32_0 = arith.constant 0 : i32
    %c0_i32_1 = arith.constant 0 : i32
    return %arg0, %c0_i32, %c0_i32_0 : i32, i32, i32
  }
  func.func @transform_2(%arg0: i32) -> (i32, i32, i32) {
    %c0_i32 = arith.constant 0 : i32
    %c0_i32_0 = arith.constant 0 : i32
    %c0_i32_1 = arith.constant 0 : i32
    return %arg0, %c0_i32, %c0_i32_0 : i32, i32, i32
  }
  func.func @transform_3(%arg0: i32) -> (i32, i32, i32) {
    %c0_i32 = arith.constant 0 : i32
    %c0_i32_0 = arith.constant 0 : i32
    %c0_i32_1 = arith.constant 0 : i32
    return %arg0, %c0_i32, %c0_i32_0 : i32, i32, i32
  }
  func.func @transform_4(%arg0: i32) -> (i32, i32, i32) {
    %c0_i32 = arith.constant 0 : i32
    %c0_i32_0 = arith.constant 0 : i32
    %c0_i32_1 = arith.constant 0 : i32
    return %arg0, %c0_i32, %c0_i32_0 : i32, i32, i32
  }
  func.func @transform_5(%arg0: i32) -> (i32, i32, i32) {
    %c0_i32 = arith.constant 0 : i32
    %c0_i32_0 = arith.constant 0 : i32
    %c0_i32_1 = arith.constant 0 : i32
    return %arg0, %c0_i32, %c0_i32_0 : i32, i32, i32
  }
  func.func @transform_6(%arg0: i32) -> (i32, i32, i32) {
    %c0_i32 = arith.constant 0 : i32
    %c0_i32_0 = arith.constant 0 : i32
    %c0_i32_1 = arith.constant 0 : i32
    return %arg0, %c0_i32, %c0_i32_0 : i32, i32, i32
  }
  func.func @transform_7(%arg0: i32) -> (i32, i32, i32) {
    %c0_i32 = arith.constant 0 : i32
    %c0_i32_0 = arith.constant 0 : i32
    %c0_i32_1 = arith.constant 0 : i32
    return %arg0, %c0_i32, %c0_i32_0 : i32, i32, i32
  }
  func.func @transform_8(%arg0: i32) -> (i32, i32, i32) {
    %c0_i32 = arith.constant 0 : i32
    %c0_i32_0 = arith.constant 0 : i32
    %c0_i32_1 = arith.constant 0 : i32
    return %arg0, %c0_i32, %c0_i32_0 : i32, i32, i32
  }
  func.func @transform_9(%arg0: i32) -> (i32, i32, i32) {
    %c0_i32 = arith.constant 0 : i32
    %c0_i32_0 = arith.constant 0 : i32
    %c0_i32_1 = arith.constant 0 : i32
    return %arg0, %c0_i32, %c0_i32_0 : i32, i32, i32
  }
  func.func @transform_10(%arg0: i32) -> (i32, i32, i32) {
    %c0_i32 = arith.constant 0 : i32
    %c0_i32_0 = arith.constant 0 : i32
    %c0_i32_1 = arith.constant 0 : i32
    return %arg0, %c0_i32, %c0_i32_0 : i32, i32, i32
  }
  func.func @transform_11(%arg0: i32) -> (i32, i32, i32) {
    %c0_i32 = arith.constant 0 : i32
    %c0_i32_0 = arith.constant 0 : i32
    %c0_i32_1 = arith.constant 0 : i32
    return %arg0, %c0_i32, %c0_i32_0 : i32, i32, i32
  }
  func.func @transform_12(%arg0: i32) -> (i32, i32, i32) {
    %c0_i32 = arith.constant 0 : i32
    %c0_i32_0 = arith.constant 0 : i32
    %c0_i32_1 = arith.constant 0 : i32
    return %arg0, %c0_i32, %c0_i32_0 : i32, i32, i32
  }
  func.func @transform_13(%arg0: i32) -> (i32, i32, i32) {
    %c0_i32 = arith.constant 0 : i32
    %c0_i32_0 = arith.constant 0 : i32
    %c0_i32_1 = arith.constant 0 : i32
    return %arg0, %c0_i32, %c0_i32_0 : i32, i32, i32
  }
  func.func @transform_14(%arg0: i32) -> (i32, i32, i32) {
    %c0_i32 = arith.constant 0 : i32
    %c0_i32_0 = arith.constant 0 : i32
    %c0_i32_1 = arith.constant 0 : i32
    return %arg0, %c0_i32, %c0_i32_0 : i32, i32, i32
  }
}

</mosaic_0001>

<llo_original>
// kernel: vae_forward.1
$region0: #{vae_forward.1}
  #allocation0 [shape = 'u32[]', space=smem, size = 0x4, offset = 0x4, fixed_abs, tag = 'smem constant byte address 0x4 - core index']
  #allocation1 [shape = 'u32[144,128]{1,0:T(1,128)}', space=vmem, size = 0x12000, scoped, tag = 'internal scratch']
  %s0 = inlined_call_operand.vmem [shape: f32[2,8,384], index: 0, kind: input, shape index: {}]
  %s1 = inlined_call_operand.vmem [shape: f32[2,8,384], index: 1, kind: input, shape index: {}]
  %s2 = inlined_call_operand.vmem [shape: f32[2,8,1], index: 2, kind: input, shape index: {}]
  %s3 = inlined_call_operand.vmem [shape: f32[2,8,1], index: 3, kind: input, shape index: {}]
  %s4 = inlined_call_operand.vmem [shape: f32[2,1,384], index: 4, kind: input, shape index: {}]
  %s5 = inlined_call_operand.vmem [shape: f32[2,384,64], index: 5, kind: input, shape index: {}]
  %s6 = inlined_call_operand.vmem [shape: f32[2,1,64], index: 6, kind: input, shape index: {}]
  %s7 = inlined_call_operand.vmem [shape: f32[2,64,64], index: 7, kind: input, shape index: {}]
  %s8 = inlined_call_operand.vmem [shape: f32[2,1,64], index: 8, kind: input, shape index: {}]
  %s9 = inlined_call_operand.vmem [shape: f32[2,32,384], index: 9, kind: input, shape index: {}]
  %s10 = inlined_call_operand.vmem [shape: f32[2,1,384], index: 10, kind: input, shape index: {}]
  %s11 = inlined_call_operand.vmem [shape: f32[2,1,384], index: 11, kind: input, shape index: {}]
  %s12 = inlined_call_operand.vmem [shape: f32[2,8,32], index: 12, kind: output, shape index: {0}]
  %s13 = inlined_call_operand.vmem [shape: f32[2,8,384], index: 13, kind: output, shape index: {1}]
  %s14 = inlined_call_operand.vmem [shape: f32[2,1,128], index: 14, kind: output, shape index: {2}]
  %15 = xla_tuple %s12, %s13, %s14
  %s16 = sld [smem:[#allocation0]]
  $region97: #{vae_forward.1} parent=0
    _
  %s18 = ssub.s32 1, %s16
  %s19 = scalar_select 0, %s18, %s16
  loop: start=0, step=1, limit=4
  $region2: #{vae_forward.1} parent=0 // loop_pre_header
    _
  $region3: #{vae_forward.1} parent=0 // loop_header
    %s21 = sphi 0, %s25
    %p22 = scmp.ge.s32.totalorder %s21, 4
    %s31 = sphi 0, %s33
    %s34 = sphi 0, %s31
    %s35 = sphi 0, %s34
    %s51 = sphi 0, %s35
    %s57 = sphi 0, %s59
    %s60 = sphi 0, %s57
    %s61 = sphi 0, %s60
    %s77 = sphi 0, %s61
    %s83 = sphi 0, %s85
    %s86 = sphi 0, %s83
    %s87 = sphi 0, %s86
    %s103 = sphi 0, %s87
    %s109 = sphi 0, %s111
    %s112 = sphi 0, %s109
    %s113 = sphi 0, %s112
    %s129 = sphi 0, %s113
    %s135 = sphi 0, %s137
    %s138 = sphi 0, %s135
    %s139 = sphi 0, %s138
    %s155 = sphi 0, %s139
    %s161 = sphi 0, %s163
    %s164 = sphi 0, %s161
    %s165 = sphi 0, %s164
    %s181 = sphi 0, %s165
    %s187 = sphi 0, %s189
    %s190 = sphi 0, %s187
    %s191 = sphi 0, %s190
    %s207 = sphi 0, %s191
    %s213 = sphi 0, %s215
    %s216 = sphi 0, %s213
    %s217 = sphi 0, %s216
    %s233 = sphi 0, %s217
    %s239 = sphi 0, %s241
    %s242 = sphi 0, %s239
    %s243 = sphi 0, %s242
    %s259 = sphi 0, %s243
    %s265 = sphi 0, %s267
    %s268 = sphi 0, %s265
    %s269 = sphi 0, %s268
    %s285 = sphi 0, %s269
    %s291 = sphi 0, %s293
    %s294 = sphi 0, %s291
    %s295 = sphi 0, %s294
    %s311 = sphi 0, %s295
    %s317 = sphi 0, %s319
    %s320 = sphi 0, %s317
    %s321 = sphi 0, %s320
    %s337 = sphi 0, %s321
    %s343 = sphi 0, %s345
    %s346 = sphi 0, %s343
    %s347 = sphi 0, %s346
    %s363 = sphi 0, %s347
    %s369 = sphi 0, %s371
    %s372 = sphi 0, %s369
    %s373 = sphi 0, %s372
    %s389 = sphi 0, %s373
    %s395 = sphi 0, %s397
    %s398 = sphi 0, %s395
    %s399 = sphi 0, %s398
    %s415 = sphi 0, %s399
  $region4: #{vae_forward.1} parent=0 // loop_header_branch
    %24 = sbr.rel (%p22) target = $region8
  $region5: #{vae_forward.1} parent=0 // loop_body
    %s26 = ssub.s32 %s21, 1
    %s27 = ssub.s32 %s21, 2
    %s28 = sadd.s32 %s21, 1
    %s29 = ssub.s32 %s21, %s28
    %p30 = scmp.eq.s32.totalorder %s29, 0
    %s32 = sadd.s32 %s31, 1
    %s33 = scalar_select %p30, %s31, %s32
    %p36 = pneg %p30
    %p37 = scmp.eq.s32.totalorder %s21, 1
    %p38 = por %p36, %p37
    %p39 = scmp.ne.s32.totalorder %s31, %s34
    %p40 = scmp.eq.s32.totalorder %s21, 0
    %p41 = por %p39, %p40
    %p42 = scmp.ne.s32.totalorder %s31, %s34
    %p43 = scmp.eq.s32.totalorder %s26, 1
    %p44 = por %p42, %p43
    %p45 = scmp.ne.s32.totalorder %s34, %s35
    %p46 = scmp.eq.s32.totalorder %s26, 0
    %p47 = por %p45, %p46
    %p48 = scmp.ne.s32.totalorder %s34, %s35
    %p49 = scmp.eq.s32.totalorder %s27, 1
    %p50 = por %p48, %p49
    %p52 = scmp.ne.s32.totalorder %s35, %s51
    %p53 = scmp.eq.s32.totalorder %s27, 0
    %p54 = por %p52, %p53
    %s55 = ssub.s32 %s21, %s28
    %p56 = scmp.eq.s32.totalorder %s55, 0
    %s58 = sadd.s32 %s57, 1
    %s59 = scalar_select %p56, %s57, %s58
    %p62 = pneg %p56
    %p63 = scmp.eq.s32.totalorder %s21, 1
    %p64 = por %p62, %p63
    %p65 = scmp.ne.s32.totalorder %s57, %s60
    %p66 = scmp.eq.s32.totalorder %s21, 0
    %p67 = por %p65, %p66
    %p68 = scmp.ne.s32.totalorder %s57, %s60
    %p69 = scmp.eq.s32.totalorder %s26, 1
    %p70 = por %p68, %p69
    %p71 = scmp.ne.s32.totalorder %s60, %s61
    %p72 = scmp.eq.s32.totalorder %s26, 0
    %p73 = por %p71, %p72
    %p74 = scmp.ne.s32.totalorder %s60, %s61
    %p75 = scmp.eq.s32.totalorder %s27, 1
    %p76 = por %p74, %p75
    %p78 = scmp.ne.s32.totalorder %s61, %s77
    %p79 = scmp.eq.s32.totalorder %s27, 0
    %p80 = por %p78, %p79
    %s81 = ssub.s32 %s21, %s28
    %p82 = scmp.eq.s32.totalorder %s81, 0
    %s84 = sadd.s32 %s83, 1
    %s85 = scalar_select %p82, %s83, %s84
    %p88 = pneg %p82
    %p89 = scmp.eq.s32.totalorder %s21, 1
    %p90 = por %p88, %p89
    %p91 = scmp.ne.s32.totalorder %s83, %s86
    %p92 = scmp.eq.s32.totalorder %s21, 0
    %p93 = por %p91, %p92
    %p94 = scmp.ne.s32.totalorder %s83, %s86
    %p95 = scmp.eq.s32.totalorder %s26, 1
    %p96 = por %p94, %p95
    %p97 = scmp.ne.s32.totalorder %s86, %s87
    %p98 = scmp.eq.s32.totalorder %s26, 0
    %p99 = por %p97, %p98
    %p100 = scmp.ne.s32.totalorder %s86, %s87
    %p101 = scmp.eq.s32.totalorder %s27, 1
    %p102 = por %p100, %p101
    %p104 = scmp.ne.s32.totalorder %s87, %s103
    %p105 = scmp.eq.s32.totalorder %s27, 0
    %p106 = por %p104, %p105
    %s107 = ssub.s32 %s21, %s28
    %p108 = scmp.eq.s32.totalorder %s107, 0
    %s110 = sadd.s32 %s109, 1
    %s111 = scalar_select %p108, %s109, %s110
    %p114 = pneg %p108
    %p115 = scmp.eq.s32.totalorder %s21, 1
    %p116 = por %p114, %p115
    %p117 = scmp.ne.s32.totalorder %s109, %s112
    %p118 = scmp.eq.s32.totalorder %s21, 0
    %p119 = por %p117, %p118
    %p120 = scmp.ne.s32.totalorder %s109, %s112
    %p121 = scmp.eq.s32.totalorder %s26, 1
    %p122 = por %p120, %p121
    %p123 = scmp.ne.s32.totalorder %s112, %s113
    %p124 = scmp.eq.s32.totalorder %s26, 0
    %p125 = por %p123, %p124
    %p126 = scmp.ne.s32.totalorder %s112, %s113
    %p127 = scmp.eq.s32.totalorder %s27, 1
    %p128 = por %p126, %p127
    %p130 = scmp.ne.s32.totalorder %s113, %s129
    %p131 = scmp.eq.s32.totalorder %s27, 0
    %p132 = por %p130, %p131
    %s133 = ssub.s32 %s21, %s28
    %p134 = scmp.eq.s32.totalorder %s133, 0
    %s136 = sadd.s32 %s135, 1
    %s137 = scalar_select %p134, %s135, %s136
    %p140 = pneg %p134
    %p141 = scmp.eq.s32.totalorder %s21, 1
    %p142 = por %p140, %p141
    %p143 = scmp.ne.s32.totalorder %s135, %s138
    %p144 = scmp.eq.s32.totalorder %s21, 0
    %p145 = por %p143, %p144
    %p146 = scmp.ne.s32.totalorder %s135, %s138
    %p147 = scmp.eq.s32.totalorder %s26, 1
    %p148 = por %p146, %p147
    %p149 = scmp.ne.s32.totalorder %s138, %s139
    %p150 = scmp.eq.s32.totalorder %s26, 0
    %p151 = por %p149, %p150
    %p152 = scmp.ne.s32.totalorder %s138, %s139
    %p153 = scmp.eq.s32.totalorder %s27, 1
    %p154 = por %p152, %p153
    %p156 = scmp.ne.s32.totalorder %s139, %s155
    %p157 = scmp.eq.s32.totalorder %s27, 0
    %p158 = por %p156, %p157
    %s159 = ssub.s32 %s21, %s28
    %p160 = scmp.eq.s32.totalorder %s159, 0
    %s162 = sadd.s32 %s161, 1
    %s163 = scalar_select %p160, %s161, %s162
    %p166 = pneg %p160
    %p167 = scmp.eq.s32.totalorder %s21, 1
    %p168 = por %p166, %p167
    %p169 = scmp.ne.s32.totalorder %s161, %s164
    %p170 = scmp.eq.s32.totalorder %s21, 0
    %p171 = por %p169, %p170
    %p172 = scmp.ne.s32.totalorder %s161, %s164
    %p173 = scmp.eq.s32.totalorder %s26, 1
    %p174 = por %p172, %p173
    %p175 = scmp.ne.s32.totalorder %s164, %s165
    %p176 = scmp.eq.s32.totalorder %s26, 0
    %p177 = por %p175, %p176
    %p178 = scmp.ne.s32.totalorder %s164, %s165
    %p179 = scmp.eq.s32.totalorder %s27, 1
    %p180 = por %p178, %p179
    %p182 = scmp.ne.s32.totalorder %s165, %s181
    %p183 = scmp.eq.s32.totalorder %s27, 0
    %p184 = por %p182, %p183
    %s185 = ssub.s32 %s21, %s28
    %p186 = scmp.eq.s32.totalorder %s185, 0
    %s188 = sadd.s32 %s187, 1
    %s189 = scalar_select %p186, %s187, %s188
    %p192 = pneg %p186
    %p193 = scmp.eq.s32.totalorder %s21, 1
    %p194 = por %p192, %p193
    %p195 = scmp.ne.s32.totalorder %s187, %s190
    %p196 = scmp.eq.s32.totalorder %s21, 0
    %p197 = por %p195, %p196
    %p198 = scmp.ne.s32.totalorder %s187, %s190
    %p199 = scmp.eq.s32.totalorder %s26, 1
    %p200 = por %p198, %p199
    %p201 = scmp.ne.s32.totalorder %s190, %s191
    %p202 = scmp.eq.s32.totalorder %s26, 0
    %p203 = por %p201, %p202
    %p204 = scmp.ne.s32.totalorder %s190, %s191
    %p205 = scmp.eq.s32.totalorder %s27, 1
    %p206 = por %p204, %p205
    %p208 = scmp.ne.s32.totalorder %s191, %s207
    %p209 = scmp.eq.s32.totalorder %s27, 0
    %p210 = por %p208, %p209
    %s211 = ssub.s32 %s21, %s28
    %p212 = scmp.eq.s32.totalorder %s211, 0
    %s214 = sadd.s32 %s213, 1
    %s215 = scalar_select %p212, %s213, %s214
    %p218 = pneg %p212
    %p219 = scmp.eq.s32.totalorder %s21, 1
    %p220 = por %p218, %p219
    %p221 = scmp.ne.s32.totalorder %s213, %s216
    %p222 = scmp.eq.s32.totalorder %s21, 0
    %p223 = por %p221, %p222
    %p224 = scmp.ne.s32.totalorder %s213, %s216
    %p225 = scmp.eq.s32.totalorder %s26, 1
    %p226 = por %p224, %p225
    %p227 = scmp.ne.s32.totalorder %s216, %s217
    %p228 = scmp.eq.s32.totalorder %s26, 0
    %p229 = por %p227, %p228
    %p230 = scmp.ne.s32.totalorder %s216, %s217
    %p231 = scmp.eq.s32.totalorder %s27, 1
    %p232 = por %p230, %p231
    %p234 = scmp.ne.s32.totalorder %s217, %s233
    %p235 = scmp.eq.s32.totalorder %s27, 0
    %p236 = por %p234, %p235
    %s237 = ssub.s32 %s21, %s28
    %p238 = scmp.eq.s32.totalorder %s237, 0
    %s240 = sadd.s32 %s239, 1
    %s241 = scalar_select %p238, %s239, %s240
    %p244 = pneg %p238
    %p245 = scmp.eq.s32.totalorder %s21, 1
    %p246 = por %p244, %p245
    %p247 = scmp.ne.s32.totalorder %s239, %s242
    %p248 = scmp.eq.s32.totalorder %s21, 0
    %p249 = por %p247, %p248
    %p250 = scmp.ne.s32.totalorder %s239, %s242
    %p251 = scmp.eq.s32.totalorder %s26, 1
    %p252 = por %p250, %p251
    %p253 = scmp.ne.s32.totalorder %s242, %s243
    %p254 = scmp.eq.s32.totalorder %s26, 0
    %p255 = por %p253, %p254
    %p256 = scmp.ne.s32.totalorder %s242, %s243
    %p257 = scmp.eq.s32.totalorder %s27, 1
    %p258 = por %p256, %p257
    %p260 = scmp.ne.s32.totalorder %s243, %s259
    %p261 = scmp.eq.s32.totalorder %s27, 0
    %p262 = por %p260, %p261
    %s263 = ssub.s32 %s21, %s28
    %p264 = scmp.eq.s32.totalorder %s263, 0
    %s266 = sadd.s32 %s265, 1
    %s267 = scalar_select %p264, %s265, %s266
    %p270 = pneg %p264
    %p271 = scmp.eq.s32.totalorder %s21, 1
    %p272 = por %p270, %p271
    %p273 = scmp.ne.s32.totalorder %s265, %s268
    %p274 = scmp.eq.s32.totalorder %s21, 0
    %p275 = por %p273, %p274
    %p276 = scmp.ne.s32.totalorder %s265, %s268
    %p277 = scmp.eq.s32.totalorder %s26, 1
    %p278 = por %p276, %p277
    %p279 = scmp.ne.s32.totalorder %s268, %s269
    %p280 = scmp.eq.s32.totalorder %s26, 0
    %p281 = por %p279, %p280
    %p282 = scmp.ne.s32.totalorder %s268, %s269
    %p283 = scmp.eq.s32.totalorder %s27, 1
    %p284 = por %p282, %p283
    %p286 = scmp.ne.s32.totalorder %s269, %s285
    %p287 = scmp.eq.s32.totalorder %s27, 0
    %p288 = por %p286, %p287
    %s289 = ssub.s32 %s21, %s28
    %p290 = scmp.eq.s32.totalorder %s289, 0
    %s292 = sadd.s32 %s291, 1
    %s293 = scalar_select %p290, %s291, %s292
    %p296 = pneg %p290
    %p297 = scmp.eq.s32.totalorder %s21, 1
    %p298 = por %p296, %p297
    %p299 = scmp.ne.s32.totalorder %s291, %s294
    %p300 = scmp.eq.s32.totalorder %s21, 0
    %p301 = por %p299, %p300
    %p302 = scmp.ne.s32.totalorder %s291, %s294
    %p303 = scmp.eq.s32.totalorder %s26, 1
    %p304 = por %p302, %p303
    %p305 = scmp.ne.s32.totalorder %s294, %s295
    %p306 = scmp.eq.s32.totalorder %s26, 0
    %p307 = por %p305, %p306
    %p308 = scmp.ne.s32.totalorder %s294, %s295
    %p309 = scmp.eq.s32.totalorder %s27, 1
    %p310 = por %p308, %p309
    %p312 = scmp.ne.s32.totalorder %s295, %s311
    %p313 = scmp.eq.s32.totalorder %s27, 0
    %p314 = por %p312, %p313
    %s315 = ssub.s32 %s21, %s28
    %p316 = scmp.eq.s32.totalorder %s315, 0
    %s318 = sadd.s32 %s317, 1
    %s319 = scalar_select %p316, %s317, %s318
    %p322 = pneg %p316
    %p323 = scmp.eq.s32.totalorder %s21, 1
    %p324 = por %p322, %p323
    %p325 = scmp.ne.s32.totalorder %s317, %s320
    %p326 = scmp.eq.s32.totalorder %s21, 0
    %p327 = por %p325, %p326
    %p328 = scmp.ne.s32.totalorder %s317, %s320
    %p329 = scmp.eq.s32.totalorder %s26, 1
    %p330 = por %p328, %p329
    %p331 = scmp.ne.s32.totalorder %s320, %s321
    %p332 = scmp.eq.s32.totalorder %s26, 0
    %p333 = por %p331, %p332
    %p334 = scmp.ne.s32.totalorder %s320, %s321
    %p335 = scmp.eq.s32.totalorder %s27, 1
    %p336 = por %p334, %p335
    %p338 = scmp.ne.s32.totalorder %s321, %s337
    %p339 = scmp.eq.s32.totalorder %s27, 0
    %p340 = por %p338, %p339
    %s341 = ssub.s32 %s21, %s28
    %p342 = scmp.eq.s32.totalorder %s341, 0
    %s344 = sadd.s32 %s343, 1
    %s345 = scalar_select %p342, %s343, %s344
    %p348 = pneg %p342
    %p349 = scmp.eq.s32.totalorder %s21, 1
    %p350 = por %p348, %p349
    %p351 = scmp.ne.s32.totalorder %s343, %s346
    %p352 = scmp.eq.s32.totalorder %s21, 0
    %p353 = por %p351, %p352
    %p354 = scmp.ne.s32.totalorder %s343, %s346
    %p355 = scmp.eq.s32.totalorder %s26, 1
    %p356 = por %p354, %p355
    %p357 = scmp.ne.s32.totalorder %s346, %s347
    %p358 = scmp.eq.s32.totalorder %s26, 0
    %p359 = por %p357, %p358
    %p360 = scmp.ne.s32.totalorder %s346, %s347
    %p361 = scmp.eq.s32.totalorder %s27, 1
    %p362 = por %p360, %p361
    %p364 = scmp.ne.s32.totalorder %s347, %s363
    %p365 = scmp.eq.s32.totalorder %s27, 0
    %p366 = por %p364, %p365
    %s367 = ssub.s32 %s21, %s28
    %p368 = scmp.eq.s32.totalorder %s367, 0
    %s370 = sadd.s32 %s369, 1
    %s371 = scalar_select %p368, %s369, %s370
    %p374 = pneg %p368
    %p375 = scmp.eq.s32.totalorder %s21, 1
    %p376 = por %p374, %p375
    %p377 = scmp.ne.s32.totalorder %s369, %s372
    %p378 = scmp.eq.s32.totalorder %s21, 0
    %p379 = por %p377, %p378
    %p380 = scmp.ne.s32.totalorder %s369, %s372
    %p381 = scmp.eq.s32.totalorder %s26, 1
    %p382 = por %p380, %p381
    %p383 = scmp.ne.s32.totalorder %s372, %s373
    %p384 = scmp.eq.s32.totalorder %s26, 0
    %p385 = por %p383, %p384
    %p386 = scmp.ne.s32.totalorder %s372, %s373
    %p387 = scmp.eq.s32.totalorder %s27, 1
    %p388 = por %p386, %p387
    %p390 = scmp.ne.s32.totalorder %s373, %s389
    %p391 = scmp.eq.s32.totalorder %s27, 0
    %p392 = por %p390, %p391
    %s393 = ssub.s32 %s21, %s28
    %p394 = scmp.eq.s32.totalorder %s393, 0
    %s396 = sadd.s32 %s395, 1
    %s397 = scalar_select %p394, %s395, %s396
    %p400 = pneg %p394
    %p401 = scmp.eq.s32.totalorder %s21, 1
    %p402 = por %p400, %p401
    %p403 = scmp.ne.s32.totalorder %s395, %s398
    %p404 = scmp.eq.s32.totalorder %s21, 0
    %p405 = por %p403, %p404
    %p406 = scmp.ne.s32.totalorder %s395, %s398
    %p407 = scmp.eq.s32.totalorder %s26, 1
    %p408 = por %p406, %p407
    %p409 = scmp.ne.s32.totalorder %s398, %s399
    %p410 = scmp.eq.s32.totalorder %s26, 0
    %p411 = por %p409, %p410
    %p412 = scmp.ne.s32.totalorder %s398, %s399
    %p413 = scmp.eq.s32.totalorder %s27, 1
    %p414 = por %p412, %p413
    %p416 = scmp.ne.s32.totalorder %s399, %s415
    %p417 = scmp.eq.s32.totalorder %s27, 0
    %p418 = por %p416, %p417
    %p419 = scmp.le.s32.totalorder 1, %s21
    %p420 = scmp.lt.s32.totalorder %s21, 3
    %p421 = pnand %p419, %p420
    %p422 = pneg %p421
    // Predicated region
    $region9: #{vae_forward.1} parent=5 // pred_check
      _
    $region10: #{vae_forward.1} parent=5 // pred_check_branch
      %424 = sbr.rel (%p421) target = $region12
    $region11: #{vae_forward.1} parent=5 // pred_region
      %s425 = ssub.s32 %s21, 1
    $region12: #{vae_forward.1} parent=5 // pred_fallthru
      _
    %p426 = scmp.lt.s32.totalorder %s21, 2
    // Predicated region
    $region13: #{vae_forward.1} parent=5 // pred_check
      %p427 = pneg %p426
    $region14: #{vae_forward.1} parent=5 // pred_check_branch
      %429 = sbr.rel (%p427) target = $region16
    $region15: #{vae_forward.1} parent=5 // pred_region
      // Predicated region
      $region17: #{vae_forward.1} parent=15 // pred_check
        %p430 = pneg %p41
      $region18: #{vae_forward.1} parent=15 // pred_check_branch
        %432 = sbr.rel (%p430) target = $region20
      $region19: #{vae_forward.1} parent=15 // pred_region
        %p433 = scmp.lt.s32.totalorder %s21, 1
        %s434 = scalar_select %p433, %s21, 1
        %s435 = smul.addr %s434, 3
        %s436 = smul.addr %s435, 8
        %s437 = scalar_lea.vmem %s0, %s436
      $region20: #{vae_forward.1} parent=15 // pred_fallthru
        _
      // Predicated region
      $region21: #{vae_forward.1} parent=15 // pred_check
        %p438 = pneg %p67
      $region22: #{vae_forward.1} parent=15 // pred_check_branch
        %440 = sbr.rel (%p438) target = $region24
      $region23: #{vae_forward.1} parent=15 // pred_region
        %p441 = scmp.lt.s32.totalorder %s21, 1
        %s442 = scalar_select %p441, %s21, 1
        %s443 = smul.addr %s442, 3
        %s444 = smul.addr %s443, 8
        %s445 = scalar_lea.vmem %s1, %s444
      $region24: #{vae_forward.1} parent=15 // pred_fallthru
        _
      // Predicated region
      $region25: #{vae_forward.1} parent=15 // pred_check
        %p446 = pneg %p93
      $region26: #{vae_forward.1} parent=15 // pred_check_branch
        %448 = sbr.rel (%p446) target = $region28
      $region27: #{vae_forward.1} parent=15 // pred_region
        %p449 = scmp.lt.s32.totalorder %s21, 1
        %s450 = scalar_select %p449, %s21, 1
        %s451 = smul.addr %s450, 8
        %s452 = scalar_lea.vmem %s2, %s451
      $region28: #{vae_forward.1} parent=15 // pred_fallthru
        _
      // Predicated region
      $region29: #{vae_forward.1} parent=15 // pred_check
        %p453 = pneg %p119
      $region30: #{vae_forward.1} parent=15 // pred_check_branch
        %455 = sbr.rel (%p453) target = $region32
      $region31: #{vae_forward.1} parent=15 // pred_region
        %p456 = scmp.lt.s32.totalorder %s21, 1
        %s457 = scalar_select %p456, %s21, 1
        %s458 = smul.addr %s457, 8
        %s459 = scalar_lea.vmem %s3, %s458
      $region32: #{vae_forward.1} parent=15 // pred_fallthru
        _
      // Predicated region
      $region33: #{vae_forward.1} parent=15 // pred_check
        %p460 = pneg %p145
      $region34: #{vae_forward.1} parent=15 // pred_check_branch
        %462 = sbr.rel (%p460) target = $region36
      $region35: #{vae_forward.1} parent=15 // pred_region
        %p463 = scmp.lt.s32.totalorder %s21, 1
        %s464 = scalar_select %p463, %s21, 1
        %s465 = smul.addr %s464, 3
        %s466 = scalar_lea.vmem %s4, %s465
      $region36: #{vae_forward.1} parent=15 // pred_fallthru
        _
      // Predicated region
      $region37: #{vae_forward.1} parent=15 // pred_check
        %p467 = pneg %p171
      $region38: #{vae_forward.1} parent=15 // pred_check_branch
        %469 = sbr.rel (%p467) target = $region40
      $region39: #{vae_forward.1} parent=15 // pred_region
        %p470 = scmp.lt.s32.totalorder %s21, 1
        %s471 = scalar_select %p470, %s21, 1
        %s472 = smul.addr %s471, 48
        %s473 = smul.addr %s472, 8
        %s474 = scalar_lea.vmem %s5, %s473
      $region40: #{vae_forward.1} parent=15 // pred_fallthru
        _
      // Predicated region
      $region41: #{vae_forward.1} parent=15 // pred_check
        %p475 = pneg %p197
      $region42: #{vae_forward.1} parent=15 // pred_check_branch
        %477 = sbr.rel (%p475) target = $region44
      $region43: #{vae_forward.1} parent=15 // pred_region
        %p478 = scmp.lt.s32.totalorder %s21, 1
        %s479 = scalar_select %p478, %s21, 1
        %s480 = scalar_lea.vmem %s6, %s479
      $region44: #{vae_forward.1} parent=15 // pred_fallthru
        _
      // Predicated region
      $region45: #{vae_forward.1} parent=15 // pred_check
        %p481 = pneg %p223
      $region46: #{vae_forward.1} parent=15 // pred_check_branch
        %483 = sbr.rel (%p481) target = $region48
      $region47: #{vae_forward.1} parent=15 // pred_region
        %p484 = scmp.lt.s32.totalorder %s21, 1
        %s485 = scalar_select %p484, %s21, 1
        %s486 = smul.addr %s485, 8
        %s487 = smul.addr %s486, 8
        %s488 = scalar_lea.vmem %s7, %s487
      $region48: #{vae_forward.1} parent=15 // pred_fallthru
        _
      // Predicated region
      $region49: #{vae_forward.1} parent=15 // pred_check
        %p489 = pneg %p249
      $region50: #{vae_forward.1} parent=15 // pred_check_branch
        %491 = sbr.rel (%p489) target = $region52
      $region51: #{vae_forward.1} parent=15 // pred_region
        %p492 = scmp.lt.s32.totalorder %s21, 1
        %s493 = scalar_select %p492, %s21, 1
        %s494 = scalar_lea.vmem %s8, %s493
      $region52: #{vae_forward.1} parent=15 // pred_fallthru
        _
      // Predicated region
      $region53: #{vae_forward.1} parent=15 // pred_check
        %p495 = pneg %p275
      $region54: #{vae_forward.1} parent=15 // pred_check_branch
        %497 = sbr.rel (%p495) target = $region56
      $region55: #{vae_forward.1} parent=15 // pred_region
        %p498 = scmp.lt.s32.totalorder %s21, 1
        %s499 = scalar_select %p498, %s21, 1
        %s500 = smul.addr %s499, 12
        %s501 = smul.addr %s500, 8
        %s502 = scalar_lea.vmem %s9, %s501
      $region56: #{vae_forward.1} parent=15 // pred_fallthru
        _
      // Predicated region
      $region57: #{vae_forward.1} parent=15 // pred_check
        %p503 = pneg %p301
      $region58: #{vae_forward.1} parent=15 // pred_check_branch
        %505 = sbr.rel (%p503) target = $region60
      $region59: #{vae_forward.1} parent=15 // pred_region
        %p506 = scmp.lt.s32.totalorder %s21, 1
        %s507 = scalar_select %p506, %s21, 1
        %s508 = smul.addr %s507, 3
        %s509 = scalar_lea.vmem %s10, %s508
      $region60: #{vae_forward.1} parent=15 // pred_fallthru
        _
      // Predicated region
      $region61: #{vae_forward.1} parent=15 // pred_check
        %p510 = pneg %p327
      $region62: #{vae_forward.1} parent=15 // pred_check_branch
        %512 = sbr.rel (%p510) target = $region64
      $region63: #{vae_forward.1} parent=15 // pred_region
        %p513 = scmp.lt.s32.totalorder %s21, 1
        %s514 = scalar_select %p513, %s21, 1
        %s515 = smul.addr %s514, 3
        %s516 = scalar_lea.vmem %s11, %s515
      $region64: #{vae_forward.1} parent=15 // pred_fallthru
        _
    $region16: #{vae_forward.1} parent=5 // pred_fallthru
      _
    %p517 = scmp.le.s32.totalorder 1, %s21
    %p518 = scmp.lt.s32.totalorder %s21, 3
    %p519 = pnand %p517, %p518
    %p520 = pneg %p519
    // Predicated region
    $region65: #{vae_forward.1} parent=5 // pred_check
      _
    $region66: #{vae_forward.1} parent=5 // pred_check_branch
      %522 = sbr.rel (%p519) target = $region68
    $region67: #{vae_forward.1} parent=5 // pred_region
      %s523 = ssub.s32 %s21, 1
      %p524 = scmp.lt.s32.totalorder %s26, 1
      %s525 = scalar_select %p524, %s26, 1
      %s526 = smul.addr %s525, 3
      %s527 = smul.addr %s526, 8
      %s528 = scalar_lea.vmem %s0, %s527
      %p529 = pneg %p47
      %p530 = pneg %p44
      %p531 = scmp.lt.s32.totalorder %s26, 1
      %s532 = scalar_select %p531, %s26, 1
      %s533 = smul.addr %s532, 3
      %s534 = smul.addr %s533, 8
      %s535 = scalar_lea.vmem %s1, %s534
      %p536 = pneg %p73
      %p537 = pneg %p70
      %p538 = scmp.lt.s32.totalorder %s26, 1
      %s539 = scalar_select %p538, %s26, 1
      %s540 = smul.addr %s539, 8
      %s541 = scalar_lea.vmem %s2, %s540
      %p542 = pneg %p99
      %p543 = pneg %p96
      %p544 = scmp.lt.s32.totalorder %s26, 1
      %s545 = scalar_select %p544, %s26, 1
      %s546 = smul.addr %s545, 8
      %s547 = scalar_lea.vmem %s3, %s546
      %p548 = pneg %p125
      %p549 = pneg %p122
      %p550 = scmp.lt.s32.totalorder %s26, 1
      %s551 = scalar_select %p550, %s26, 1
      %s552 = smul.addr %s551, 3
      %s553 = scalar_lea.vmem %s4, %s552
      %p554 = pneg %p151
      %p555 = pneg %p148
      %p556 = scmp.lt.s32.totalorder %s26, 1
      %s557 = scalar_select %p556, %s26, 1
      %s558 = smul.addr %s557, 48
      %s559 = smul.addr %s558, 8
      %s560 = scalar_lea.vmem %s5, %s559
      %p561 = pneg %p177
      %p562 = pneg %p174
      %p563 = scmp.lt.s32.totalorder %s26, 1
      %s564 = scalar_select %p563, %s26, 1
      %s565 = scalar_lea.vmem %s6, %s564
      %p566 = pneg %p203
      %p567 = pneg %p200
      %p568 = scmp.lt.s32.totalorder %s26, 1
      %s569 = scalar_select %p568, %s26, 1
      %s570 = smul.addr %s569, 8
      %s571 = smul.addr %s570, 8
      %s572 = scalar_lea.vmem %s7, %s571
      %p573 = pneg %p229
      %p574 = pneg %p226
      %p575 = scmp.lt.s32.totalorder %s26, 1
      %s576 = scalar_select %p575, %s26, 1
      %s577 = scalar_lea.vmem %s8, %s576
      %p578 = pneg %p255
      %p579 = pneg %p252
      %p580 = scmp.lt.s32.totalorder %s26, 1
      %s581 = scalar_select %p580, %s26, 1
      %s582 = smul.addr %s581, 12
      %s583 = smul.addr %s582, 8
      %s584 = scalar_lea.vmem %s9, %s583
      %p585 = pneg %p281
      %p586 = pneg %p278
      %p587 = scmp.lt.s32.totalorder %s26, 1
      %s588 = scalar_select %p587, %s26, 1
      %s589 = smul.addr %s588, 3
      %s590 = scalar_lea.vmem %s10, %s589
      %p591 = pneg %p307
      %p592 = pneg %p304
      %p593 = scmp.lt.s32.totalorder %s26, 1
      %s594 = scalar_select %p593, %s26, 1
      %s595 = smul.addr %s594, 3
      %s596 = scalar_lea.vmem %s11, %s595
      %p597 = pneg %p333
      %p598 = pneg %p330
      %p599 = pneg %p359
      %p600 = pneg %p356
      %p601 = scmp.lt.s32.totalorder %s26, 1
      %s602 = scalar_select %p601, %s26, 1
      %s603 = smul.addr %s602, 8
      %s604 = scalar_lea.vmem %s12, %s603
      %p605 = pneg %p385
      %p606 = pneg %p382
      %p607 = scmp.lt.s32.totalorder %s26, 1
      %s608 = scalar_select %p607, %s26, 1
      %s609 = smul.addr %s608, 3
      %s610 = smul.addr %s609, 8
      %s611 = scalar_lea.vmem %s13, %s610
      %p612 = pneg %p411
      %p613 = pneg %p408
      %p614 = scmp.lt.s32.totalorder %s26, 1
      %s615 = scalar_select %p614, %s26, 1
      %s616 = scalar_lea.vmem %s14, %s615
      %p617 = scmp.lt.s32.totalorder %s26, 1
      %s618 = scalar_select %p617, %s26, 1
      %s619 = smul.addr %s618, 3
      %s620 = smul.addr %s619, 8
      %s621 = scalar_lea.vmem %s0, %s620
      %p622 = scmp.lt.s32.totalorder %s26, 1
      %s623 = scalar_select %p622, %s26, 1
      %s624 = smul.addr %s623, 3
      %s625 = smul.addr %s624, 8
      %s626 = scalar_lea.vmem %s1, %s625
      %p627 = scmp.lt.s32.totalorder %s26, 1
      %s628 = scalar_select %p627, %s26, 1
      %s629 = smul.addr %s628, 8
      %s630 = scalar_lea.vmem %s2, %s629
      %p631 = scmp.lt.s32.totalorder %s26, 1
      %s632 = scalar_select %p631, %s26, 1
      %s633 = smul.addr %s632, 8
      %s634 = scalar_lea.vmem %s3, %s633
      %p635 = scmp.lt.s32.totalorder %s26, 1
      %s636 = scalar_select %p635, %s26, 1
      %s637 = smul.addr %s636, 3
      %s638 = scalar_lea.vmem %s4, %s637
      %p639 = scmp.lt.s32.totalorder %s26, 1
      %s640 = scalar_select %p639, %s26, 1
      %s641 = smul.addr %s640, 48
      %s642 = smul.addr %s641, 8
      %s643 = scalar_lea.vmem %s5, %s642
      %p644 = scmp.lt.s32.totalorder %s26, 1
      %s645 = scalar_select %p644, %s26, 1
      %s646 = scalar_lea.vmem %s6, %s645
      %p647 = scmp.lt.s32.totalorder %s26, 1
      %s648 = scalar_select %p647, %s26, 1
      %s649 = smul.addr %s648, 8
      %s650 = smul.addr %s649, 8
      %s651 = scalar_lea.vmem %s7, %s650
      %p652 = scmp.lt.s32.totalorder %s26, 1
      %s653 = scalar_select %p652, %s26, 1
      %s654 = scalar_lea.vmem %s8, %s653
      %p655 = scmp.lt.s32.totalorder %s26, 1
      %s656 = scalar_select %p655, %s26, 1
      %s657 = smul.addr %s656, 12
      %s658 = smul.addr %s657, 8
      %s659 = scalar_lea.vmem %s9, %s658
      %p660 = scmp.lt.s32.totalorder %s26, 1
      %s661 = scalar_select %p660, %s26, 1
      %s662 = smul.addr %s661, 3
      %s663 = scalar_lea.vmem %s10, %s662
      %p664 = scmp.lt.s32.totalorder %s26, 1
      %s665 = scalar_select %p664, %s26, 1
      %s666 = smul.addr %s665, 3
      %s667 = scalar_lea.vmem %s11, %s666
      %p668 = scmp.lt.s32.totalorder %s26, 1
      %s669 = scalar_select %p668, %s26, 1
      %s670 = smul.addr %s669, 8
      %s671 = scalar_lea.vmem %s12, %s670
      %p672 = scmp.lt.s32.totalorder %s26, 1
      %s673 = scalar_select %p672, %s26, 1
      %s674 = smul.addr %s673, 3
      %s675 = smul.addr %s674, 8
      %s676 = scalar_lea.vmem %s13, %s675
      %p677 = scmp.lt.s32.totalorder %s26, 1
      %s678 = scalar_select %p677, %s26, 1
      %s679 = scalar_lea.vmem %s14, %s678
      %v680 = vld [vmem:[%s621] sm:$0xff]
      %v681 = vld [vmem:[%s621 + $0x8] sm:$0xff]
      %v682 = vld [vmem:[%s621 + $0x10] sm:$0xff]
      %v683 = vld [vmem:[%s643] sm:$0xff]
      %v684 = vld [vmem:[%s643 + $0x8] sm:$0xff]
      %v685 = vld [vmem:[%s643 + $0x10] sm:$0xff]
      %v686 = vld [vmem:[%s643 + $0x18] sm:$0xff]
      %v687 = vld [vmem:[%s643 + $0x20] sm:$0xff]
      %v688 = vld [vmem:[%s643 + $0x28] sm:$0xff]
      %v689 = vld [vmem:[%s643 + $0x30] sm:$0xff]
      %v690 = vld [vmem:[%s643 + $0x38] sm:$0xff]
      %v691 = vld [vmem:[%s643 + $0x40] sm:$0xff]
      %v692 = vld [vmem:[%s643 + $0x48] sm:$0xff]
      %v693 = vld [vmem:[%s643 + $0x50] sm:$0xff]
      %v694 = vld [vmem:[%s643 + $0x58] sm:$0xff]
      %v695 = vld [vmem:[%s643 + $0x60] sm:$0xff]
      %v696 = vld [vmem:[%s643 + $0x68] sm:$0xff]
      %v697 = vld [vmem:[%s643 + $0x70] sm:$0xff]
      %v698 = vld [vmem:[%s643 + $0x78] sm:$0xff]
      %v699 = vld [vmem:[%s643 + $0x80] sm:$0xff]
      %v700 = vld [vmem:[%s643 + $0x88] sm:$0xff]
      %v701 = vld [vmem:[%s643 + $0x90] sm:$0xff]
      %v702 = vld [vmem:[%s643 + $0x98] sm:$0xff]
      %v703 = vld [vmem:[%s643 + $0xa0] sm:$0xff]
      %v704 = vld [vmem:[%s643 + $0xa8] sm:$0xff]
      %v705 = vld [vmem:[%s643 + $0xb0] sm:$0xff]
      %v706 = vld [vmem:[%s643 + $0xb8] sm:$0xff]
      %v707 = vld [vmem:[%s643 + $0xc0] sm:$0xff]
      %v708 = vld [vmem:[%s643 + $0xc8] sm:$0xff]
      %v709 = vld [vmem:[%s643 + $0xd0] sm:$0xff]
      %v710 = vld [vmem:[%s643 + $0xd8] sm:$0xff]
      %v711 = vld [vmem:[%s643 + $0xe0] sm:$0xff]
      %v712 = vld [vmem:[%s643 + $0xe8] sm:$0xff]
      %v713 = vld [vmem:[%s643 + $0xf0] sm:$0xff]
      %v714 = vld [vmem:[%s643 + $0xf8] sm:$0xff]
      %v715 = vld [vmem:[%s643 + $0x100] sm:$0xff]
      %v716 = vld [vmem:[%s643 + $0x108] sm:$0xff]
      %v717 = vld [vmem:[%s643 + $0x110] sm:$0xff]
      %v718 = vld [vmem:[%s643 + $0x118] sm:$0xff]
      %v719 = vld [vmem:[%s643 + $0x120] sm:$0xff]
      %v720 = vld [vmem:[%s643 + $0x128] sm:$0xff]
      %v721 = vld [vmem:[%s643 + $0x130] sm:$0xff]
      %v722 = vld [vmem:[%s643 + $0x138] sm:$0xff]
      %v723 = vld [vmem:[%s643 + $0x140] sm:$0xff]
      %v724 = vld [vmem:[%s643 + $0x148] sm:$0xff]
      %v725 = vld [vmem:[%s643 + $0x150] sm:$0xff]
      %v726 = vld [vmem:[%s643 + $0x158] sm:$0xff]
      %v727 = vld [vmem:[%s643 + $0x160] sm:$0xff]
      %v728 = vld [vmem:[%s643 + $0x168] sm:$0xff]
      %v729 = vld [vmem:[%s643 + $0x170] sm:$0xff]
      %v730 = vld [vmem:[%s643 + $0x178] sm:$0xff]
      %v731 = vld [vmem:[%s646] sm:$0x1]
      %v733 = vlaneseq
      %v734 = vshrl.u32 %v733, 7
      %v735 = vsub.s32 0, %v734
      %v736 = vrot.slane %v731, %v735
      %738 = vmatprep.subr.mxu0 0.0
      %739 = vmatpush1.msra.mxu0 %v683
      %740 = vmatprep.subr.mxu0 0.0
      %741 = vmatpush1.msra.mxu0 %v684
      %742 = vmatprep.subr.mxu0 0.0
      %743 = vmatpush1.msra.mxu0 %v685
      %744 = vmatprep.subr.mxu0 0.0
      %745 = vmatpush1.msra.mxu0 %v686
      %746 = vmatprep.subr.mxu0 0.0
      %747 = vmatpush1.msra.mxu0 %v687
      %748 = vmatprep.subr.mxu0 0.0
      %749 = vmatpush1.msra.mxu0 %v688
      %750 = vmatprep.subr.mxu0 0.0
      %751 = vmatpush1.msra.mxu0 %v689
      %752 = vmatprep.subr.mxu0 0.0
      %753 = vmatpush1.msra.mxu0 %v690
      %754 = vmatprep.subr.mxu0 0.0
      %755 = vmatpush1.msra.mxu0 %v691
      %756 = vmatprep.subr.mxu0 0.0
      %757 = vmatpush1.msra.mxu0 %v692
      %758 = vmatprep.subr.mxu0 0.0
      %759 = vmatpush1.msra.mxu0 %v693
      %760 = vmatprep.subr.mxu0 0.0
      %761 = vmatpush1.msra.mxu0 %v694
      %762 = vmatprep.subr.mxu0 0.0
      %763 = vmatpush1.msra.mxu0 %v695
      %764 = vmatprep.subr.mxu0 0.0
      %765 = vmatpush1.msra.mxu0 %v696
      %766 = vmatprep.subr.mxu0 0.0
      %767 = vmatpush1.msra.mxu0 %v697
      %768 = vmatprep.subr.mxu0 0.0
      %769 = vmatpush1.msra.mxu0 %v698
      %770 = vmatprep.subr.mxu0 0.0
      %771 = vmatpush1.msra.mxu0 %v699
      %772 = vmatprep.subr.mxu0 0.0
      %773 = vmatpush1.msra.mxu0 %v700
      %774 = vmatprep.subr.mxu0 0.0
      %775 = vmatpush1.msra.mxu0 %v701
      %776 = vmatprep.subr.mxu0 0.0
      %777 = vmatpush1.msra.mxu0 %v702
      %778 = vmatprep.subr.mxu0 0.0
      %779 = vmatpush1.msra.mxu0 %v703
      %780 = vmatprep.subr.mxu0 0.0
      %781 = vmatpush1.msra.mxu0 %v704
      %782 = vmatprep.subr.mxu0 0.0
      %783 = vmatpush1.msra.mxu0 %v705
      %784 = vmatprep.subr.mxu0 0.0
      %785 = vmatpush1.msra.mxu0 %v706
      %786 = vmatprep.subr.mxu0 0.0
      %787 = vmatpush1.msra.mxu0 %v707
      %788 = vmatprep.subr.mxu0 0.0
      %789 = vmatpush1.msra.mxu0 %v708
      %790 = vmatprep.subr.mxu0 0.0
      %791 = vmatpush1.msra.mxu0 %v709
      %792 = vmatprep.subr.mxu0 0.0
      %793 = vmatpush1.msra.mxu0 %v710
      %794 = vmatprep.subr.mxu0 0.0
      %795 = vmatpush1.msra.mxu0 %v711
      %796 = vmatprep.subr.mxu0 0.0
      %797 = vmatpush1.msra.mxu0 %v712
      %798 = vmatprep.subr.mxu0 0.0
      %799 = vmatpush1.msra.mxu0 %v713
      %800 = vmatprep.subr.mxu0 0.0
      %801 = vmatpush1.msra.mxu0 %v714
      %802 = vmatprep.mubr.f32.mxu0 %v681
      %803 = vmatmul.mubr.f32.gmra.mrb[0].mxu0 %v680
      %v804 = vpop.f32.mrb[0].mxu0
      %v805 = vadd.f32 %v736, %v804
      %v806 = vpop.f32.mrb[0].mxu0
      %807 = vdwg.mxu0
      %808 = vmatprep.subr.mxu0 0.0
      %809 = vmatpush1.msra.mxu0 %v715
      %810 = vmatprep.subr.mxu0 0.0
      %811 = vmatpush1.msra.mxu0 %v716
      %812 = vmatprep.subr.mxu0 0.0
      %813 = vmatpush1.msra.mxu0 %v717
      %814 = vmatprep.subr.mxu0 0.0
      %815 = vmatpush1.msra.mxu0 %v718
      %816 = vmatprep.subr.mxu0 0.0
      %817 = vmatpush1.msra.mxu0 %v719
      %818 = vmatprep.subr.mxu0 0.0
      %819 = vmatpush1.msra.mxu0 %v720
      %820 = vmatprep.subr.mxu0 0.0
      %821 = vmatpush1.msra.mxu0 %v721
      %822 = vmatprep.subr.mxu0 0.0
      %823 = vmatpush1.msra.mxu0 %v722
      %824 = vmatprep.subr.mxu0 0.0
      %825 = vmatpush1.msra.mxu0 %v723
      %826 = vmatprep.subr.mxu0 0.0
      %827 = vmatpush1.msra.mxu0 %v724
      %828 = vmatprep.subr.mxu0 0.0
      %829 = vmatpush1.msra.mxu0 %v725
      %830 = vmatprep.subr.mxu0 0.0
      %831 = vmatpush1.msra.mxu0 %v726
      %832 = vmatprep.subr.mxu0 0.0
      %833 = vmatpush1.msra.mxu0 %v727
      %834 = vmatprep.subr.mxu0 0.0
      %835 = vmatpush1.msra.mxu0 %v728
      %836 = vmatprep.subr.mxu0 0.0
      %837 = vmatpush1.msra.mxu0 %v729
      %838 = vmatprep.subr.mxu0 0.0
      %839 = vmatpush1.msra.mxu0 %v730
      %840 = vmatprep.subr.mxu0 0.0
      %841 = vmatpush1.msra.mxu0 0.0
      %842 = vmatprep.subr.mxu0 0.0
      %843 = vmatpush1.msra.mxu0 0.0
      %844 = vmatprep.subr.mxu0 0.0
      %845 = vmatpush1.msra.mxu0 0.0
      %846 = vmatprep.subr.mxu0 0.0
      %847 = vmatpush1.msra.mxu0 0.0
      %848 = vmatprep.subr.mxu0 0.0
      %849 = vmatpush1.msra.mxu0 0.0
      %850 = vmatprep.subr.mxu0 0.0
      %851 = vmatpush1.msra.mxu0 0.0
      %852 = vmatprep.subr.mxu0 0.0
      %853 = vmatpush1.msra.mxu0 0.0
      %854 = vmatprep.subr.mxu0 0.0
      %855 = vmatpush1.msra.mxu0 0.0
      %856 = vmatprep.subr.mxu0 0.0
      %857 = vmatpush1.msra.mxu0 0.0
      %858 = vmatprep.subr.mxu0 0.0
      %859 = vmatpush1.msra.mxu0 0.0
      %860 = vmatprep.subr.mxu0 0.0
      %861 = vmatpush1.msra.mxu0 0.0
      %862 = vmatprep.subr.mxu0 0.0
      %863 = vmatpush1.msra.mxu0 0.0
      %864 = vmatprep.subr.mxu0 0.0
      %865 = vmatpush1.msra.mxu0 0.0
      %866 = vmatprep.subr.mxu0 0.0
      %867 = vmatpush1.msra.mxu0 0.0
      %868 = vmatprep.subr.mxu0 0.0
      %869 = vmatpush1.msra.mxu0 0.0
      %870 = vmatprep.subr.mxu0 0.0
      %871 = vmatpush1.msra.mxu0 0.0
      %872 = vmatprep.mubr.f32.mxu0 0.0
      %873 = vmatmul.mubr.f32.gmra.mrb[0].mxu0 %v682
      %v874 = vpop.f32.mrb[0].mxu0
      %v875 = vadd.f32 %v805, %v874
      %v876 = vpop.f32.mrb[0].mxu0
      %877 = vdwg.mxu0
      %v878 = vmax.f32 %v875, 0.0
      %v879 = vld [vmem:[%s651] sm:$0xff]
      %v880 = vld [vmem:[%s651 + $0x8] sm:$0xff]
      %v881 = vld [vmem:[%s651 + $0x10] sm:$0xff]
      %v882 = vld [vmem:[%s651 + $0x18] sm:$0xff]
      %v883 = vld [vmem:[%s651 + $0x20] sm:$0xff]
      %v884 = vld [vmem:[%s651 + $0x28] sm:$0xff]
      %v885 = vld [vmem:[%s651 + $0x30] sm:$0xff]
      %v886 = vld [vmem:[%s651 + $0x38] sm:$0xff]
      %v887 = vld [vmem:[%s654] sm:$0x1]
      %v889 = vlaneseq
      %v890 = vshrl.u32 %v889, 7
      %v891 = vsub.s32 0, %v890
      %v892 = vrot.slane %v887, %v891
      %vm894 = vcmask 523264
      %v896 = vsel %vm894, %v878, 0
      %898 = vmatprep.subr.mxu0 0.0
      %899 = vmatpush1.msra.mxu0 %v879
      %900 = vmatprep.subr.mxu0 0.0
      %901 = vmatpush1.msra.mxu0 %v880
      %902 = vmatprep.subr.mxu0 0.0
      %903 = vmatpush1.msra.mxu0 %v881
      %904 = vmatprep.subr.mxu0 0.0
      %905 = vmatpush1.msra.mxu0 %v882
      %906 = vmatprep.subr.mxu0 0.0
      %907 = vmatpush1.msra.mxu0 %v883
      %908 = vmatprep.subr.mxu0 0.0
      %909 = vmatpush1.msra.mxu0 %v884
      %910 = vmatprep.subr.mxu0 0.0
      %911 = vmatpush1.msra.mxu0 %v885
      %912 = vmatprep.subr.mxu0 0.0
      %913 = vmatpush1.msra.mxu0 %v886
      %914 = vmatprep.subr.mxu0 0.0
      %915 = vmatpush1.msra.mxu0 0.0
      %916 = vmatprep.subr.mxu0 0.0
      %917 = vmatpush1.msra.mxu0 0.0
      %918 = vmatprep.subr.mxu0 0.0
      %919 = vmatpush1.msra.mxu0 0.0
      %920 = vmatprep.subr.mxu0 0.0
      %921 = vmatpush1.msra.mxu0 0.0
      %922 = vmatprep.subr.mxu0 0.0
      %923 = vmatpush1.msra.mxu0 0.0
      %924 = vmatprep.subr.mxu0 0.0
      %925 = vmatpush1.msra.mxu0 0.0
      %926 = vmatprep.subr.mxu0 0.0
      %927 = vmatpush1.msra.mxu0 0.0
      %928 = vmatprep.subr.mxu0 0.0
      %929 = vmatpush1.msra.mxu0 0.0
      %930 = vmatprep.subr.mxu0 0.0
      %931 = vmatpush1.msra.mxu0 0.0
      %932 = vmatprep.subr.mxu0 0.0
      %933 = vmatpush1.msra.mxu0 0.0
      %934 = vmatprep.subr.mxu0 0.0
      %935 = vmatpush1.msra.mxu0 0.0
      %936 = vmatprep.subr.mxu0 0.0
      %937 = vmatpush1.msra.mxu0 0.0
      %938 = vmatprep.subr.mxu0 0.0
      %939 = vmatpush1.msra.mxu0 0.0
      %940 = vmatprep.subr.mxu0 0.0
      %941 = vmatpush1.msra.mxu0 0.0
      %942 = vmatprep.subr.mxu0 0.0
      %943 = vmatpush1.msra.mxu0 0.0
      %944 = vmatprep.subr.mxu0 0.0
      %945 = vmatpush1.msra.mxu0 0.0
      %946 = vmatprep.subr.mxu0 0.0
      %947 = vmatpush1.msra.mxu0 0.0
      %948 = vmatprep.subr.mxu0 0.0
      %949 = vmatpush1.msra.mxu0 0.0
      %950 = vmatprep.subr.mxu0 0.0
      %951 = vmatpush1.msra.mxu0 0.0
      %952 = vmatprep.subr.mxu0 0.0
      %953 = vmatpush1.msra.mxu0 0.0
      %954 = vmatprep.subr.mxu0 0.0
      %955 = vmatpush1.msra.mxu0 0.0
      %956 = vmatprep.subr.mxu0 0.0
      %957 = vmatpush1.msra.mxu0 0.0
      %958 = vmatprep.subr.mxu0 0.0
      %959 = vmatpush1.msra.mxu0 0.0
      %960 = vmatprep.subr.mxu0 0.0
      %961 = vmatpush1.msra.mxu0 0.0
      %962 = vmatprep.mubr.f32.mxu0 0.0
      %963 = vmatmul.mubr.f32.gmra.mrb[0].mxu0 %v896
      %v964 = vpop.f32.mrb[0].mxu0
      %v965 = vadd.f32 %v892, %v964
      %v966 = vpop.f32.mrb[0].mxu0
      %967 = vdwg.mxu0
      %vm968 = vcmask 261120
      %969 = vst.msk [vmem:[%s671] sm:$0xff] %vm968, %v965
      %v970 = vld [vmem:[%s638] sm:$0x7]
      %v971 = vld [vmem:[%s659] sm:$0xff]
      %v972 = vld [vmem:[%s659 + $0x8] sm:$0xff]
      %v973 = vld [vmem:[%s659 + $0x10] sm:$0xff]
      %v974 = vld [vmem:[%s659 + $0x18] sm:$0xff]
      %v975 = vld [vmem:[%s659 + $0x20] sm:$0xff]
      %v976 = vld [vmem:[%s659 + $0x28] sm:$0xff]
      %v977 = vld [vmem:[%s659 + $0x30] sm:$0xff]
      %v978 = vld [vmem:[%s659 + $0x38] sm:$0xff]
      %v979 = vld [vmem:[%s659 + $0x40] sm:$0xff]
      %v980 = vld [vmem:[%s659 + $0x48] sm:$0xff]
      %v981 = vld [vmem:[%s659 + $0x50] sm:$0xff]
      %v982 = vld [vmem:[%s659 + $0x58] sm:$0xff]
      %v983 = vsub.f32 %v970, 1.0
      %v984 = vmul.f32 %v983, 1e+30
      %v986 = vlaneseq
      %v987 = vshrl.u32 %v986, 7
      %v988 = vsub.s32 0, %v987
      %v989 = vrot.slane %v984, %v988
      %v990 = vlaneseq
      %v991 = vshrl.u32 %v990, 7
      %v992 = vsub.s32 1, %v991
      %v993 = vrot.slane %v984, %v992
      %v994 = vlaneseq
      %v995 = vshrl.u32 %v994, 7
      %v996 = vsub.s32 2, %v995
      %v997 = vrot.slane %v984, %v996
      %v1002 = vsel %vm968, %v965, 0
      %1004 = vmatprep.subr.mxu0 %v972
      %1005 = vmatpush1.msra.mxu0 %v971
      %1006 = vmatprep.subr.mxu0 %v975
      %1007 = vmatpush1.msra.mxu0 %v974
      %1008 = vmatprep.subr.mxu0 %v978
      %1009 = vmatpush1.msra.mxu0 %v977
      %1010 = vmatprep.subr.mxu0 %v981
      %1011 = vmatpush1.msra.mxu0 %v980
      %1012 = vmatprep.subr.mxu0 0.0
      %1013 = vmatpush1.msra.mxu0 0.0
      %1014 = vmatprep.subr.mxu0 0.0
      %1015 = vmatpush1.msra.mxu0 0.0
      %1016 = vmatprep.subr.mxu0 0.0
      %1017 = vmatpush1.msra.mxu0 0.0
      %1018 = vmatprep.subr.mxu0 0.0
      %1019 = vmatpush1.msra.mxu0 0.0
      %1020 = vmatprep.subr.mxu0 0.0
      %1021 = vmatpush1.msra.mxu0 0.0
      %1022 = vmatprep.subr.mxu0 0.0
      %1023 = vmatpush1.msra.mxu0 0.0
      %1024 = vmatprep.subr.mxu0 0.0
      %1025 = vmatpush1.msra.mxu0 0.0
      %1026 = vmatprep.subr.mxu0 0.0
      %1027 = vmatpush1.msra.mxu0 0.0
      %1028 = vmatprep.subr.mxu0 0.0
      %1029 = vmatpush1.msra.mxu0 0.0
      %1030 = vmatprep.subr.mxu0 0.0
      %1031 = vmatpush1.msra.mxu0 0.0
      %1032 = vmatprep.subr.mxu0 0.0
      %1033 = vmatpush1.msra.mxu0 0.0
      %1034 = vmatprep.subr.mxu0 0.0
      %1035 = vmatpush1.msra.mxu0 0.0
      %1036 = vmatprep.subr.mxu0 0.0
      %1037 = vmatpush1.msra.mxu0 0.0
      %1038 = vmatprep.subr.mxu0 0.0
      %1039 = vmatpush1.msra.mxu0 0.0
      %1040 = vmatprep.subr.mxu0 0.0
      %1041 = vmatpush1.msra.mxu0 0.0
      %1042 = vmatprep.subr.mxu0 0.0
      %1043 = vmatpush1.msra.mxu0 0.0
      %1044 = vmatprep.subr.mxu0 0.0
      %1045 = vmatpush1.msra.mxu0 0.0
      %1046 = vmatprep.subr.mxu0 0.0
      %1047 = vmatpush1.msra.mxu0 0.0
      %1048 = vmatprep.subr.mxu0 0.0
      %1049 = vmatpush1.msra.mxu0 0.0
      %1050 = vmatprep.subr.mxu0 0.0
      %1051 = vmatpush1.msra.mxu0 0.0
      %1052 = vmatprep.subr.mxu0 0.0
      %1053 = vmatpush1.msra.mxu0 0.0
      %1054 = vmatprep.subr.mxu0 0.0
      %1055 = vmatpush1.msra.mxu0 0.0
      %1056 = vmatprep.subr.mxu0 0.0
      %1057 = vmatpush1.msra.mxu0 0.0
      %1058 = vmatprep.subr.mxu0 0.0
      %1059 = vmatpush1.msra.mxu0 0.0
      %1060 = vmatprep.subr.mxu0 0.0
      %1061 = vmatpush1.msra.mxu0 0.0
      %1062 = vmatprep.subr.mxu0 0.0
      %1063 = vmatpush1.msra.mxu0 0.0
      %1064 = vmatprep.subr.mxu0 0.0
      %1065 = vmatpush1.msra.mxu0 0.0
      %1066 = vmatprep.subr.mxu0 0.0
      %1067 = vmatpush1.msra.mxu0 0.0
      %1068 = vmatprep.mubr.f32.mxu0 0.0
      %1069 = vmatmul.mubr.f32.gmra.mrb[0].mxu0 %v1002
      %v1070 = vpop.f32.mrb[0].mxu0
      %v1071 = vadd.f32 %v989, %v1070
      %v1072 = vpop.f32.mrb[0].mxu0
      %v1073 = vadd.f32 %v993, %v1072
      %1074 = vdwg.mxu0
      %1075 = vmatprep.subr.mxu0 0.0
      %1076 = vmatpush1.msra.mxu0 %v973
      %1077 = vmatprep.subr.mxu0 0.0
      %1078 = vmatpush1.msra.mxu0 %v976
      %1079 = vmatprep.subr.mxu0 0.0
      %1080 = vmatpush1.msra.mxu0 %v979
      %1081 = vmatprep.subr.mxu0 0.0
      %1082 = vmatpush1.msra.mxu0 %v982
      %1083 = vmatprep.subr.mxu0 0.0
      %1084 = vmatpush1.msra.mxu0 0.0
      %1085 = vmatprep.subr.mxu0 0.0
      %1086 = vmatpush1.msra.mxu0 0.0
      %1087 = vmatprep.subr.mxu0 0.0
      %1088 = vmatpush1.msra.mxu0 0.0
      %1089 = vmatprep.subr.mxu0 0.0
      %1090 = vmatpush1.msra.mxu0 0.0
      %1091 = vmatprep.subr.mxu0 0.0
      %1092 = vmatpush1.msra.mxu0 0.0
      %1093 = vmatprep.subr.mxu0 0.0
      %1094 = vmatpush1.msra.mxu0 0.0
      %1095 = vmatprep.subr.mxu0 0.0
      %1096 = vmatpush1.msra.mxu0 0.0
      %1097 = vmatprep.subr.mxu0 0.0
      %1098 = vmatpush1.msra.mxu0 0.0
      %1099 = vmatprep.subr.mxu0 0.0
      %1100 = vmatpush1.msra.mxu0 0.0
      %1101 = vmatprep.subr.mxu0 0.0
      %1102 = vmatpush1.msra.mxu0 0.0
      %1103 = vmatprep.subr.mxu0 0.0
      %1104 = vmatpush1.msra.mxu0 0.0
      %1105 = vmatprep.subr.mxu0 0.0
      %1106 = vmatpush1.msra.mxu0 0.0
      %1107 = vmatprep.subr.mxu0 0.0
      %1108 = vmatpush1.msra.mxu0 0.0
      %1109 = vmatprep.subr.mxu0 0.0
      %1110 = vmatpush1.msra.mxu0 0.0
      %1111 = vmatprep.subr.mxu0 0.0
      %1112 = vmatpush1.msra.mxu0 0.0
      %1113 = vmatprep.subr.mxu0 0.0
      %1114 = vmatpush1.msra.mxu0 0.0
      %1115 = vmatprep.subr.mxu0 0.0
      %1116 = vmatpush1.msra.mxu0 0.0
      %1117 = vmatprep.subr.mxu0 0.0
      %1118 = vmatpush1.msra.mxu0 0.0
      %1119 = vmatprep.subr.mxu0 0.0
      %1120 = vmatpush1.msra.mxu0 0.0
      %1121 = vmatprep.subr.mxu0 0.0
      %1122 = vmatpush1.msra.mxu0 0.0
      %1123 = vmatprep.subr.mxu0 0.0
      %1124 = vmatpush1.msra.mxu0 0.0
      %1125 = vmatprep.subr.mxu0 0.0
      %1126 = vmatpush1.msra.mxu0 0.0
      %1127 = vmatprep.subr.mxu0 0.0
      %1128 = vmatpush1.msra.mxu0 0.0
      %1129 = vmatprep.subr.mxu0 0.0
      %1130 = vmatpush1.msra.mxu0 0.0
      %1131 = vmatprep.subr.mxu0 0.0
      %1132 = vmatpush1.msra.mxu0 0.0
      %1133 = vmatprep.subr.mxu0 0.0
      %1134 = vmatpush1.msra.mxu0 0.0
      %1135 = vmatprep.subr.mxu0 0.0
      %1136 = vmatpush1.msra.mxu0 0.0
      %1137 = vmatprep.subr.mxu0 0.0
      %1138 = vmatpush1.msra.mxu0 0.0
      %1139 = vmatprep.mubr.f32.mxu0 0.0
      %1140 = vmatmul.mubr.f32.gmra.mrb[0].mxu0 %v1002
      %v1141 = vpop.f32.mrb[0].mxu0
      %v1142 = vadd.f32 %v997, %v1141
      %v1143 = vpop.f32.mrb[0].mxu0
      %1144 = vdwg.mxu0
      %v1145 = vmax.f32 %v1071, %v1073
      %v1146 = vmax.f32 %v1145, %v1142
      %1147 = vmax.xlane.f32.xlu0 %v1146
      %v1148 = vpop.xlane.xlu0 %1147
      %v1149 = vsub.f32 %v1071, %v1148
      %v1150 = vsub.f32 %v1073, %v1148
      %v1151 = vsub.f32 %v1142, %v1148
      %v1152 = vmul.f32 %v1149, 1.442695
      %v1153 = vpow.pop %v1152
      %v1154 = vmul.f32 %v1150, 1.442695
      %v1155 = vpow.pop %v1154
      %v1156 = vmul.f32 %v1151, 1.442695
      %v1157 = vpow.pop %v1156
      %v1158 = vadd.f32 %v1153, %v1155
      %v1159 = vadd.f32 %v1158, %v1157
      %1160 = vadd.xlane.f32.xlu0 %v1159
      %v1161 = vpop.xlane.xlu0 %1160
      %v1162 = vrcp.pop %v1161
      %v1163 = vmul.f32 %v1161, %v1162
      %v1164 = vsub.f32 2.0, %v1163
      %v1165 = vmul.f32 %v1162, %v1164
      %v1166 = vmul.f32 %v1153, %v1165
      %v1167 = vmul.f32 %v1155, %v1165
      %v1168 = vmul.f32 %v1157, %v1165
      %v1169 = vld [vmem:[%s630] sm:$0xff]
      %1171 = vset.pattern.permute.xlu0 0
      %1172 = vperm.xlu0 %1171, %v1169
      %v1173 = vpop.permute.xlu0 %1172
      %v1175 = vmul.f32 %v1173, %v1166
      %v1176 = vmul.f32 %v1173, %v1167
      %v1177 = vmul.f32 %v1173, %v1168
      %1178 = vst [vmem:[%s676] sm:$0xff] %v1175
      %1179 = vst [vmem:[%s676 + $0x8] sm:$0xff] %v1176
      %1180 = vst [vmem:[%s676 + $0x10] sm:$0xff] %v1177
      %v1181 = vld [vmem:[%s626] sm:$0xff]
      %v1182 = vld [vmem:[%s626 + $0x8] sm:$0xff]
      %v1183 = vld [vmem:[%s626 + $0x10] sm:$0xff]
      %v1184 = vld [vmem:[%s663] sm:$0x7]
      %v1186 = vlaneseq
      %v1187 = vshrl.u32 %v1186, 7
      %v1188 = vsub.s32 0, %v1187
      %v1189 = vrot.slane %v1184, %v1188
      %v1190 = vlaneseq
      %v1191 = vshrl.u32 %v1190, 7
      %v1192 = vsub.s32 1, %v1191
      %v1193 = vrot.slane %v1184, %v1192
      %v1194 = vlaneseq
      %v1195 = vshrl.u32 %v1194, 7
      %v1196 = vsub.s32 2, %v1195
      %v1197 = vrot.slane %v1184, %v1196
      %v1201 = vadd.f32 %v1189, %v1175
      %v1202 = vadd.f32 %v1193, %v1176
      %v1203 = vadd.f32 %v1197, %v1177
      %v1204 = vadd.f32 %v1201, 1e-08
      %v1205 = vadd.f32 %v1202, 1e-08
      %v1206 = vadd.f32 %v1203, 1e-08
      %v1207 = vlog2.pop %v1204
      %v1208 = vmul.f32 %v1207, 0.6931472
      %v1209 = vlog2.pop %v1205
      %v1210 = vmul.f32 %v1209, 0.6931472
      %v1211 = vlog2.pop %v1206
      %v1212 = vmul.f32 %v1211, 0.6931472
      %v1213 = vld [vmem:[%s634] sm:$0xff]
      %1215 = vset.pattern.permute.xlu0 0
      %1216 = vperm.xlu0 %1215, %v1213
      %v1217 = vpop.permute.xlu0 %1216
      %v1219 = vadd.f32 %v1217, %v1149
      %v1220 = vadd.f32 %v1217, %v1150
      %v1221 = vadd.f32 %v1217, %v1151
      %v1222 = vlog2.pop %v1161
      %v1223 = vmul.f32 %v1222, 0.6931472
      %v1224 = vsub.f32 %v1219, %v1223
      %v1225 = vsub.f32 %v1220, %v1223
      %v1226 = vsub.f32 %v1221, %v1223
      %v1227 = vmax.f32 %v1224, -18.420681
      %v1228 = vmax.f32 %v1225, -18.420681
      %v1229 = vmax.f32 %v1226, -18.420681
      %v1230 = vld [vmem:[%s667] sm:$0x7]
      %v1231 = vadd.f32 %v1189, %v1181
      %v1232 = vadd.f32 %v1193, %v1182
      %v1233 = vadd.f32 %v1197, %v1183
      %v1234 = vmul.f32 %v1231, %v1208
      %v1235 = vmul.f32 %v1232, %v1210
      %v1236 = vmul.f32 %v1233, %v1212
      %v1238 = vlaneseq
      %v1239 = vshrl.u32 %v1238, 7
      %v1240 = vsub.s32 0, %v1239
      %v1241 = vrot.slane %v1230, %v1240
      %v1242 = vlaneseq
      %v1243 = vshrl.u32 %v1242, 7
      %v1244 = vsub.s32 1, %v1243
      %v1245 = vrot.slane %v1230, %v1244
      %v1246 = vlaneseq
      %v1247 = vshrl.u32 %v1246, 7
      %v1248 = vsub.s32 2, %v1247
      %v1249 = vrot.slane %v1230, %v1248
      %v1253 = vsub.f32 %v1241, %v1234
      %v1254 = vsub.f32 %v1245, %v1235
      %v1255 = vsub.f32 %v1249, %v1236
      %v1256 = vmul.f32 %v1181, %v1227
      %v1257 = vmul.f32 %v1182, %v1228
      %v1258 = vmul.f32 %v1183, %v1229
      %v1259 = vadd.f32 %v1253, %v1256
      %v1260 = vadd.f32 %v1254, %v1257
      %v1261 = vadd.f32 %v1255, %v1258
      %v1262 = vsub.f32 %v1231, 1.0
      %v1263 = vsub.f32 %v1232, 1.0
      %v1264 = vsub.f32 %v1233, 1.0
      %v1265 = vmin.f32 %v1262, 10000.0
      %v1266 = vmin.f32 %v1263, 10000.0
      %v1267 = vmin.f32 %v1264, 10000.0
      %v1268 = vadd.f32 %v1265, 60.458332
      %v1269 = vadd.f32 %v1266, 60.458332
      %v1270 = vadd.f32 %v1267, 60.458332
      %v1271 = vmul.f32 %v1268, %v1265
      %v1272 = vmul.f32 %v1269, %v1266
      %v1273 = vmul.f32 %v1270, %v1267
      %v1274 = vadd.f32 %v1271, 1599.0425
      %v1275 = vadd.f32 %v1272, 1599.0425
      %v1276 = vadd.f32 %v1273, 1599.0425
      %v1277 = vmul.f32 %v1274, %v1265
      %v1278 = vmul.f32 %v1275, %v1266
      %v1279 = vmul.f32 %v1276, %v1267
      %v1280 = vadd.f32 %v1277, 24165.51
      %v1281 = vadd.f32 %v1278, 24165.51
      %v1282 = vadd.f32 %v1279, 24165.51
      %v1283 = vmul.f32 %v1280, %v1265
      %v1284 = vmul.f32 %v1281, %v1266
      %v1285 = vmul.f32 %v1282, %v1267
      %v1286 = vadd.f32 %v1283, 228235.22
      %v1287 = vadd.f32 %v1284, 228235.22
      %v1288 = vadd.f32 %v1285, 228235.22
      %v1289 = vmul.f32 %v1286, %v1265
      %v1290 = vmul.f32 %v1287, %v1266
      %v1291 = vmul.f32 %v1288, %v1267
      %v1292 = vadd.f32 %v1289, 1379496.3
      %v1293 = vadd.f32 %v1290, 1379496.3
      %v1294 = vadd.f32 %v1291, 1379496.3
      %v1295 = vmul.f32 %v1292, %v1265
      %v1296 = vmul.f32 %v1293, %v1266
      %v1297 = vmul.f32 %v1294, %v1267
      %v1298 = vadd.f32 %v1295, 5210869.0
      %v1299 = vadd.f32 %v1296, 5210869.0
      %v1300 = vadd.f32 %v1297, 5210869.0
      %v1301 = vmul.f32 %v1298, %v1265
      %v1302 = vmul.f32 %v1299, %v1266
      %v1303 = vmul.f32 %v1300, %v1267
      %v1304 = vadd.f32 %v1301, 11246929.0
      %v1305 = vadd.f32 %v1302, 11246929.0
      %v1306 = vadd.f32 %v1303, 11246929.0
      %v1307 = vmul.f32 %v1304, %v1265
      %v1308 = vmul.f32 %v1305, %v1266
      %v1309 = vmul.f32 %v1306, %v1267
      %v1310 = vadd.f32 %v1307, 10619610.0
      %v1311 = vadd.f32 %v1308, 10619610.0
      %v1312 = vadd.f32 %v1309, 10619610.0
      %v1313 = vadd.f32 %v1265, 36.0
      %v1314 = vadd.f32 %v1266, 36.0
      %v1315 = vadd.f32 %v1267, 36.0
      %v1316 = vmul.f32 %v1313, %v1265
      %v1317 = vmul.f32 %v1314, %v1266
      %v1318 = vmul.f32 %v1315, %v1267
      %v1319 = vadd.f32 %v1316, 546.0
      %v1320 = vadd.f32 %v1317, 546.0
      %v1321 = vadd.f32 %v1318, 546.0
      %v1322 = vmul.f32 %v1319, %v1265
      %v1323 = vmul.f32 %v1320, %v1266
      %v1324 = vmul.f32 %v1321, %v1267
      %v1325 = vadd.f32 %v1322, 4536.0
      %v1326 = vadd.f32 %v1323, 4536.0
      %v1327 = vadd.f32 %v1324, 4536.0
      %v1328 = vmul.f32 %v1325, %v1265
      %v1329 = vmul.f32 %v1326, %v1266
      %v1330 = vmul.f32 %v1327, %v1267
      %v1331 = vadd.f32 %v1328, 22449.0
      %v1332 = vadd.f32 %v1329, 22449.0
      %v1333 = vadd.f32 %v1330, 22449.0
      %v1334 = vmul.f32 %v1331, %v1265
      %v1335 = vmul.f32 %v1332, %v1266
      %v1336 = vmul.f32 %v1333, %v1267
      %v1337 = vadd.f32 %v1334, 67284.0
      %v1338 = vadd.f32 %v1335, 67284.0
      %v1339 = vadd.f32 %v1336, 67284.0
      %v1340 = vmul.f32 %v1337, %v1265
      %v1341 = vmul.f32 %v1338, %v1266
      %v1342 = vmul.f32 %v1339, %v1267
      %v1343 = vadd.f32 %v1340, 118124.0
      %v1344 = vadd.f32 %v1341, 118124.0
      %v1345 = vadd.f32 %v1342, 118124.0
      %v1346 = vmul.f32 %v1343, %v1265
      %v1347 = vmul.f32 %v1344, %v1266
      %v1348 = vmul.f32 %v1345, %v1267
      %v1349 = vadd.f32 %v1346, 109584.0
      %v1350 = vadd.f32 %v1347, 109584.0
      %v1351 = vadd.f32 %v1348, 109584.0
      %v1352 = vmul.f32 %v1349, %v1265
      %v1353 = vmul.f32 %v1350, %v1266
      %v1354 = vmul.f32 %v1351, %v1267
      %v1355 = vadd.f32 %v1352, 40320.0
      %v1356 = vadd.f32 %v1353, 40320.0
      %v1357 = vadd.f32 %v1354, 40320.0
      %v1358 = vrcp.pop %v1355
      %v1359 = vmul.f32 %v1310, %v1358
      %v1360 = vrcp.pop %v1356
      %v1361 = vmul.f32 %v1311, %v1360
      %v1362 = vrcp.pop %v1357
      %v1363 = vmul.f32 %v1312, %v1362
      %v1364 = vadd.f32 %v1262, 7.0
      %v1365 = vadd.f32 %v1263, 7.0
      %v1366 = vadd.f32 %v1264, 7.0
      %v1367 = vadd.f32 %v1364, 0.5
      %v1368 = vadd.f32 %v1365, 0.5
      %v1369 = vadd.f32 %v1366, 0.5
      %v1370 = vadd.f32 %v1262, 0.5
      %v1371 = vadd.f32 %v1263, 0.5
      %v1372 = vadd.f32 %v1264, 0.5
      %v1373 = vlog2.pop %v1367
      %v1374 = vmul.f32 %v1373, 0.6931472
      %v1375 = vlog2.pop %v1368
      %v1376 = vmul.f32 %v1375, 0.6931472
      %v1377 = vlog2.pop %v1369
      %v1378 = vmul.f32 %v1377, 0.6931472
      %v1379 = vmul.f32 %v1370, %v1374
      %v1380 = vmul.f32 %v1371, %v1376
      %v1381 = vmul.f32 %v1372, %v1378
      %v1382 = vadd.f32 %v1379, 0.9189385
      %v1383 = vadd.f32 %v1380, 0.9189385
      %v1384 = vadd.f32 %v1381, 0.9189385
      %v1385 = vsub.f32 %v1382, %v1367
      %v1386 = vsub.f32 %v1383, %v1368
      %v1387 = vsub.f32 %v1384, %v1369
      %v1388 = vlog2.pop %v1359
      %v1389 = vmul.f32 %v1388, 0.6931472
      %v1390 = vlog2.pop %v1361
      %v1391 = vmul.f32 %v1390, 0.6931472
      %v1392 = vlog2.pop %v1363
      %v1393 = vmul.f32 %v1392, 0.6931472
      %v1394 = vadd.f32 %v1385, %v1389
      %v1395 = vadd.f32 %v1386, %v1391
      %v1396 = vadd.f32 %v1387, %v1393
      %v1397 = vadd.f32 %v1259, %v1394
      %v1398 = vadd.f32 %v1260, %v1395
      %v1399 = vadd.f32 %v1261, %v1396
      %v1400 = vadd.f32 %v1181, 1.0
      %v1401 = vadd.f32 %v1182, 1.0
      %v1402 = vadd.f32 %v1183, 1.0
      %v1403 = vsub.f32 %v1400, 1.0
      %v1404 = vsub.f32 %v1401, 1.0
      %v1405 = vsub.f32 %v1402, 1.0
      %v1406 = vmin.f32 %v1403, 10000.0
      %v1407 = vmin.f32 %v1404, 10000.0
      %v1408 = vmin.f32 %v1405, 10000.0
      %v1409 = vadd.f32 %v1406, 60.458332
      %v1410 = vadd.f32 %v1407, 60.458332
      %v1411 = vadd.f32 %v1408, 60.458332
      %v1412 = vmul.f32 %v1409, %v1406
      %v1413 = vmul.f32 %v1410, %v1407
      %v1414 = vmul.f32 %v1411, %v1408
      %v1415 = vadd.f32 %v1412, 1599.0425
      %v1416 = vadd.f32 %v1413, 1599.0425
      %v1417 = vadd.f32 %v1414, 1599.0425
      %v1418 = vmul.f32 %v1415, %v1406
      %v1419 = vmul.f32 %v1416, %v1407
      %v1420 = vmul.f32 %v1417, %v1408
      %v1421 = vadd.f32 %v1418, 24165.51
      %v1422 = vadd.f32 %v1419, 24165.51
      %v1423 = vadd.f32 %v1420, 24165.51
      %v1424 = vmul.f32 %v1421, %v1406
      %v1425 = vmul.f32 %v1422, %v1407
      %v1426 = vmul.f32 %v1423, %v1408
      %v1427 = vadd.f32 %v1424, 228235.22
      %v1428 = vadd.f32 %v1425, 228235.22
      %v1429 = vadd.f32 %v1426, 228235.22
      %v1430 = vmul.f32 %v1427, %v1406
      %v1431 = vmul.f32 %v1428, %v1407
      %v1432 = vmul.f32 %v1429, %v1408
      %v1433 = vadd.f32 %v1430, 1379496.3
      %v1434 = vadd.f32 %v1431, 1379496.3
      %v1435 = vadd.f32 %v1432, 1379496.3
      %v1436 = vmul.f32 %v1433, %v1406
      %v1437 = vmul.f32 %v1434, %v1407
      %v1438 = vmul.f32 %v1435, %v1408
      %v1439 = vadd.f32 %v1436, 5210869.0
      %v1440 = vadd.f32 %v1437, 5210869.0
      %v1441 = vadd.f32 %v1438, 5210869.0
      %v1442 = vmul.f32 %v1439, %v1406
      %v1443 = vmul.f32 %v1440, %v1407
      %v1444 = vmul.f32 %v1441, %v1408
      %v1445 = vadd.f32 %v1442, 11246929.0
      %v1446 = vadd.f32 %v1443, 11246929.0
      %v1447 = vadd.f32 %v1444, 11246929.0
      %v1448 = vmul.f32 %v1445, %v1406
      %v1449 = vmul.f32 %v1446, %v1407
      %v1450 = vmul.f32 %v1447, %v1408
      %v1451 = vadd.f32 %v1448, 10619610.0
      %v1452 = vadd.f32 %v1449, 10619610.0
      %v1453 = vadd.f32 %v1450, 10619610.0
      %v1454 = vadd.f32 %v1406, 36.0
      %v1455 = vadd.f32 %v1407, 36.0
      %v1456 = vadd.f32 %v1408, 36.0
      %v1457 = vmul.f32 %v1454, %v1406
      %v1458 = vmul.f32 %v1455, %v1407
      %v1459 = vmul.f32 %v1456, %v1408
      %v1460 = vadd.f32 %v1457, 546.0
      %v1461 = vadd.f32 %v1458, 546.0
      %v1462 = vadd.f32 %v1459, 546.0
      %v1463 = vmul.f32 %v1460, %v1406
      %v1464 = vmul.f32 %v1461, %v1407
      %v1465 = vmul.f32 %v1462, %v1408
      %v1466 = vadd.f32 %v1463, 4536.0
      %v1467 = vadd.f32 %v1464, 4536.0
      %v1468 = vadd.f32 %v1465, 4536.0
      %v1469 = vmul.f32 %v1466, %v1406
      %v1470 = vmul.f32 %v1467, %v1407
      %v1471 = vmul.f32 %v1468, %v1408
      %v1472 = vadd.f32 %v1469, 22449.0
      %v1473 = vadd.f32 %v1470, 22449.0
      %v1474 = vadd.f32 %v1471, 22449.0
      %v1475 = vmul.f32 %v1472, %v1406
      %v1476 = vmul.f32 %v1473, %v1407
      %v1477 = vmul.f32 %v1474, %v1408
      %v1478 = vadd.f32 %v1475, 67284.0
      %v1479 = vadd.f32 %v1476, 67284.0
      %v1480 = vadd.f32 %v1477, 67284.0
      %v1481 = vmul.f32 %v1478, %v1406
      %v1482 = vmul.f32 %v1479, %v1407
      %v1483 = vmul.f32 %v1480, %v1408
      %v1484 = vadd.f32 %v1481, 118124.0
      %v1485 = vadd.f32 %v1482, 118124.0
      %v1486 = vadd.f32 %v1483, 118124.0
      %v1487 = vmul.f32 %v1484, %v1406
      %v1488 = vmul.f32 %v1485, %v1407
      %v1489 = vmul.f32 %v1486, %v1408
      %v1490 = vadd.f32 %v1487, 109584.0
      %v1491 = vadd.f32 %v1488, 109584.0
      %v1492 = vadd.f32 %v1489, 109584.0
      %v1493 = vmul.f32 %v1490, %v1406
      %v1494 = vmul.f32 %v1491, %v1407
      %v1495 = vmul.f32 %v1492, %v1408
      %v1496 = vadd.f32 %v1493, 40320.0
      %v1497 = vadd.f32 %v1494, 40320.0
      %v1498 = vadd.f32 %v1495, 40320.0
      %v1499 = vrcp.pop %v1496
      %v1500 = vmul.f32 %v1451, %v1499
      %v1501 = vrcp.pop %v1497
      %v1502 = vmul.f32 %v1452, %v1501
      %v1503 = vrcp.pop %v1498
      %v1504 = vmul.f32 %v1453, %v1503
      %v1505 = vadd.f32 %v1403, 7.0
      %v1506 = vadd.f32 %v1404, 7.0
      %v1507 = vadd.f32 %v1405, 7.0
      %v1508 = vadd.f32 %v1505, 0.5
      %v1509 = vadd.f32 %v1506, 0.5
      %v1510 = vadd.f32 %v1507, 0.5
      %v1511 = vadd.f32 %v1403, 0.5
      %v1512 = vadd.f32 %v1404, 0.5
      %v1513 = vadd.f32 %v1405, 0.5
      %v1514 = vlog2.pop %v1508
      %v1515 = vmul.f32 %v1514, 0.6931472
      %v1516 = vlog2.pop %v1509
      %v1517 = vmul.f32 %v1516, 0.6931472
      %v1518 = vlog2.pop %v1510
      %v1519 = vmul.f32 %v1518, 0.6931472
      %v1520 = vmul.f32 %v1511, %v1515
      %v1521 = vmul.f32 %v1512, %v1517
      %v1522 = vmul.f32 %v1513, %v1519
      %v1523 = vadd.f32 %v1520, 0.9189385
      %v1524 = vadd.f32 %v1521, 0.9189385
      %v1525 = vadd.f32 %v1522, 0.9189385
      %v1526 = vsub.f32 %v1523, %v1508
      %v1527 = vsub.f32 %v1524, %v1509
      %v1528 = vsub.f32 %v1525, %v1510
      %v1529 = vlog2.pop %v1500
      %v1530 = vmul.f32 %v1529, 0.6931472
      %v1531 = vlog2.pop %v1502
      %v1532 = vmul.f32 %v1531, 0.6931472
      %v1533 = vlog2.pop %v1504
      %v1534 = vmul.f32 %v1533, 0.6931472
      %v1535 = vadd.f32 %v1526, %v1530
      %v1536 = vadd.f32 %v1527, %v1532
      %v1537 = vadd.f32 %v1528, %v1534
      %v1538 = vsub.f32 %v1397, %v1535
      %v1539 = vsub.f32 %v1398, %v1536
      %v1540 = vsub.f32 %v1399, %v1537
      %v1542 = vlaneseq
      %v1543 = vshrl.u32 %v1542, 7
      %v1544 = vsub.s32 0, %v1543
      %v1545 = vrot.slane %v970, %v1544
      %v1546 = vlaneseq
      %v1547 = vshrl.u32 %v1546, 7
      %v1548 = vsub.s32 1, %v1547
      %v1549 = vrot.slane %v970, %v1548
      %v1550 = vlaneseq
      %v1551 = vshrl.u32 %v1550, 7
      %v1552 = vsub.s32 2, %v1551
      %v1553 = vrot.slane %v970, %v1552
      %v1557 = vmul.f32 %v1538, %v1545
      %v1558 = vmul.f32 %v1539, %v1549
      %v1559 = vmul.f32 %v1540, %v1553
      %v1560 = vadd.f32 %v1557, %v1558
      %v1561 = vadd.f32 %v1560, %v1559
      %1562 = vadd.xlane.f32.xlu0 %v1561
      %v1563 = vpop.xlane.xlu0 %1562
      %v1564 = vmul.f32 %v965, 1.442695
      %v1565 = vpow.pop %v1564
      %v1566 = vmul.f32 %v965, %v965
      %1568 = vrot.lane.b32.xlu0 %v1566, 32
      %v1569 = vpop.permute.xlu0 %1568
      %v1571 = vadd.f32 %v1565, %v1569
      %v1572 = vsub.f32 %v1571, %v965
      %v1573 = vsub.f32 %v1572, 1.0
      %1575 = vrot.lane.b32.xlu0 %v1573, 96
      %v1576 = vpop.permute.xlu0 %1575
      %v1578 = vsel %vm968, %v1576, 0.0
      %1579 = vadd.xlane.f32.xlu0 %v1578
      %v1580 = vpop.xlane.xlu0 %1579
      %v1581 = vmul.f32 %v1580, 0.5
      %v1582 = vrot.slane %v1563, 4
      %v1583 = vadd.f32 %v1563, %v1582
      %v1584 = vrot.slane %v1583, 2
      %v1585 = vadd.f32 %v1583, %v1584
      %v1586 = vrot.slane %v1585, 1
      %v1587 = vadd.f32 %v1585, %v1586
      %v1588 = vrcp.pop 8.0
      %v1589 = vmul.f32 %v1587, %v1588
      %v1590 = vrot.slane %v1581, 4
      %v1591 = vadd.f32 %v1581, %v1590
      %v1592 = vrot.slane %v1591, 2
      %v1593 = vadd.f32 %v1591, %v1592
      %v1594 = vrot.slane %v1593, 1
      %v1595 = vadd.f32 %v1593, %v1594
      %v1596 = vmul.f32 %v1595, %v1588
      %v1597 = vlaneseq
      %v1598 = vand.u32 %v1597, 127
      %vm1599 = vcmp.eq.s32.totalorder %v1598, 0
      %vm1600 = vcmp.eq.s32.totalorder %v1598, 1
      %v1601 = vsel %vm1600, %v1596, 0.0
      %v1602 = vsel %vm1599, %v1589, %v1601
      %1603 = vst [vmem:[%s679] sm:$0x1] %v1602
      %p1604 = scmp.lt.s32.totalorder %s26, 1
      %s1605 = scalar_select %p1604, %s26, 1
      %s1606 = smul.addr %s1605, 8
      %s1607 = scalar_lea.vmem %s12, %s1606
      %p1608 = scmp.lt.s32.totalorder %s26, 1
      %s1609 = scalar_select %p1608, %s26, 1
      %s1610 = smul.addr %s1609, 3
      %s1611 = smul.addr %s1610, 8
      %s1612 = scalar_lea.vmem %s13, %s1611
      %p1613 = scmp.lt.s32.totalorder %s26, 1
      %s1614 = scalar_select %p1613, %s26, 1
      %s1615 = scalar_lea.vmem %s14, %s1614
      // Predicated region
      $region69: #{vae_forward.1} parent=67 // pred_check
        %p1616 = pneg %p356
      $region70: #{vae_forward.1} parent=67 // pred_check_branch
        %1618 = sbr.rel (%p1616) target = $region72
      $region71: #{vae_forward.1} parent=67 // pred_region
        _
      $region72: #{vae_forward.1} parent=67 // pred_fallthru
        _
      // Predicated region
      $region73: #{vae_forward.1} parent=67 // pred_check
        %p1619 = pneg %p382
      $region74: #{vae_forward.1} parent=67 // pred_check_branch
        %1621 = sbr.rel (%p1619) target = $region76
      $region75: #{vae_forward.1} parent=67 // pred_region
        _
      $region76: #{vae_forward.1} parent=67 // pred_fallthru
        _
      // Predicated region
      $region77: #{vae_forward.1} parent=67 // pred_check
        %p1622 = pneg %p408
      $region78: #{vae_forward.1} parent=67 // pred_check_branch
        %1624 = sbr.rel (%p1622) target = $region80
      $region79: #{vae_forward.1} parent=67 // pred_region
        _
      $region80: #{vae_forward.1} parent=67 // pred_fallthru
        _
    $region68: #{vae_forward.1} parent=5 // pred_fallthru
      _
    %p1625 = scmp.le.s32.totalorder 2, %s21
    // Predicated region
    $region81: #{vae_forward.1} parent=5 // pred_check
      %p1626 = pneg %p1625
    $region82: #{vae_forward.1} parent=5 // pred_check_branch
      %1628 = sbr.rel (%p1626) target = $region84
    $region83: #{vae_forward.1} parent=5 // pred_region
      %s1629 = ssub.s32 %s21, 2
      // Predicated region
      $region85: #{vae_forward.1} parent=83 // pred_check
        %p1630 = pneg %p362
      $region86: #{vae_forward.1} parent=83 // pred_check_branch
        %1632 = sbr.rel (%p1630) target = $region88
      $region87: #{vae_forward.1} parent=83 // pred_region
        %p1633 = scmp.lt.s32.totalorder %s27, 1
        %s1634 = scalar_select %p1633, %s27, 1
        %s1635 = smul.addr %s1634, 8
        %s1636 = scalar_lea.vmem %s12, %s1635
      $region88: #{vae_forward.1} parent=83 // pred_fallthru
        _
      // Predicated region
      $region89: #{vae_forward.1} parent=83 // pred_check
        %p1637 = pneg %p388
      $region90: #{vae_forward.1} parent=83 // pred_check_branch
        %1639 = sbr.rel (%p1637) target = $region92
      $region91: #{vae_forward.1} parent=83 // pred_region
        %p1640 = scmp.lt.s32.totalorder %s27, 1
        %s1641 = scalar_select %p1640, %s27, 1
        %s1642 = smul.addr %s1641, 3
        %s1643 = smul.addr %s1642, 8
        %s1644 = scalar_lea.vmem %s13, %s1643
      $region92: #{vae_forward.1} parent=83 // pred_fallthru
        _
      // Predicated region
      $region93: #{vae_forward.1} parent=83 // pred_check
        %p1645 = pneg %p414
      $region94: #{vae_forward.1} parent=83 // pred_check_branch
        %1647 = sbr.rel (%p1645) target = $region96
      $region95: #{vae_forward.1} parent=83 // pred_region
        %p1648 = scmp.lt.s32.totalorder %s27, 1
        %s1649 = scalar_select %p1648, %s27, 1
        %s1650 = scalar_lea.vmem %s14, %s1649
      $region96: #{vae_forward.1} parent=83 // pred_fallthru
        _
    $region84: #{vae_forward.1} parent=5 // pred_fallthru
      _
  $region6: #{vae_forward.1} parent=0 // loop_footer
    %s25 = sadd.s32 1, %s21
  $region7: #{vae_forward.1} parent=0 // loop_footer_branch
    %20 = sbr.rel target = $region3
  $region8: #{vae_forward.1} parent=0 // loop_exit
    _

</llo_original>
